<compile_context>
chip_gen: v7x
topology: tpu7x:2x2x1
jax: 0.10.0
libtpu: 0.0.40
codegen_flags: <defaults>
</compile_context>

<pallas_src>
import functools

import jax
import jax.numpy as jnp
from jax import lax
from jax.experimental import pallas as pl
from jax.experimental.pallas import tpu as pltpu


def _gru_classifier_kernel(x_ref, wih_ref, whh_ref, bi_ref, bhn_ref,
                           wfc_ref, bfc_ref, out_ref, gi_ref, h_ref,
                           *, Tc, BB, HP):
    """One (batch-block, time-chunk) grid step.

    x_ref  : (Tc, BB, I)    time-major input chunk, f32
    wih_ref: (I, 3*HP)      gate order [r | z | n], each gate padded to HP lanes
    whh_ref: (HP, 3*HP)     padded rows/cols are zero
    bi_ref : (1, 3*HP)      [b_ir+b_hr | b_iz+b_hz | b_in], f32
    bhn_ref: (1, HP)        b_hn (added inside the r-multiply, PyTorch semantics)
    wfc_ref: (HP, CP), bfc_ref: (1, CP), out_ref: (BB, CP)
    gi_ref : (Tc, BB, 3*HP) f32 VMEM scratch (hoisted input-side pre-activations)
    h_ref  : (BB, HP)       f32 VMEM scratch (hidden state, persists across ti)
    """
    ti = pl.program_id(1)

    @pl.when(ti == 0)
    def _init():
        h_ref[...] = jnp.zeros_like(h_ref)

    wdt = wih_ref.dtype
    I = x_ref.shape[-1]

    # Hoisted input-side gate pre-activations for the whole chunk: ONE MXU call.
    # (Tc, BB, I) -> (Tc*BB, I) is layout-preserving because BB is a multiple
    # of 8 sublanes.
    xf = x_ref[...].reshape(Tc * BB, I).astype(wdt)
    gi = jnp.dot(xf, wih_ref[...], preferred_element_type=jnp.float32) + bi_ref[...]
    # Time-major scratch: gi_ref[t] is a contiguous, tile-aligned (BB, 3*HP) block.
    gi_ref[...] = gi.reshape(Tc, BB, 3 * HP)

    whh = whh_ref[...]
    bhn = bhn_ref[...]

    def step(t, h):
        gi_t = gi_ref[t]                                            # (BB, 3*HP)
        # Fused 3-gate hidden matmul; follow-up lever: weight-stationary whh via
        # explicit pltpu.matmul_push_rhs / matmul_acc_lhs (see header comment).
        gh = jnp.dot(h.astype(wdt), whh, preferred_element_type=jnp.float32)
        r = jax.nn.sigmoid(gi_t[:, 0:HP] + gh[:, 0:HP])
        z = jax.nn.sigmoid(gi_t[:, HP:2 * HP] + gh[:, HP:2 * HP])
        n = jnp.tanh(gi_t[:, 2 * HP:3 * HP] + r * (gh[:, 2 * HP:3 * HP] + bhn))
        return n + z * (h - n)                                      # == (1-z)*n + z*h

    h = lax.fori_loop(0, Tc, step, h_ref[...], unroll=min(Tc, 8))
    h_ref[...] = h

    @pl.when(ti == pl.num_programs(1) - 1)
    def _finalize():
        logits = jnp.dot(h.astype(wdt), wfc_ref[...],
                         preferred_element_type=jnp.float32) + bfc_ref[...]
        out_ref[...] = logits.astype(out_ref.dtype)                 # (BB, CP) lane-dense


def prepare_params(w_ih, w_hh, b_ih, b_hh, w_fc, b_fc, *, hp=128, cp=128,
                   weight_dtype=jnp.bfloat16):
    """One-time conversion of PyTorch-layout parameters into the padded,
    gate-concatenated layout the kernel consumes.

    w_ih: (3H, I), w_hh: (3H, H), b_ih/b_hh: (3H,), w_fc: (C, H), b_fc: (C,)
    Gate order along the 3H axis is PyTorch's [r, z, n].
    """
    H = w_hh.shape[1]
    C = w_fc.shape[0]
    assert hp >= H and cp >= C

    def pad_cols(m):                      # (rows, H) -> (rows, hp)
        return jnp.pad(m, ((0, 0), (0, hp - H)))

    wih_g = [w_ih[g * H:(g + 1) * H, :].T for g in range(3)]       # (I, H) each
    whh_g = [w_hh[g * H:(g + 1) * H, :].T for g in range(3)]       # (H, H) each

    wih_p = jnp.concatenate([pad_cols(w) for w in wih_g], axis=1)  # (I, 3*hp)
    whh_p = jnp.concatenate([pad_cols(w) for w in whh_g], axis=1)  # (H, 3*hp)
    whh_p = jnp.pad(whh_p, ((0, hp - H), (0, 0)))                  # (hp, 3*hp)

    def pad_vec(v):                       # (H,) -> (1, hp)
        return jnp.pad(v, (0, hp - H)).reshape(1, hp)

    b_r = pad_vec(b_ih[0:H] + b_hh[0:H])            # pre-summed r bias
    b_z = pad_vec(b_ih[H:2 * H] + b_hh[H:2 * H])    # pre-summed z bias
    b_in = pad_vec(b_ih[2 * H:3 * H])               # n input-side bias
    bi_p = jnp.concatenate([b_r, b_z, b_in], axis=1).astype(jnp.float32)
    bhn_p = pad_vec(b_hh[2 * H:3 * H]).astype(jnp.float32)         # (1, hp)

    wfc_p = jnp.pad(w_fc.T, ((0, hp - H), (0, cp - C)))            # (hp, cp)
    bfc_p = jnp.pad(b_fc, (0, cp - C)).reshape(1, cp).astype(jnp.float32)

    return (wih_p.astype(weight_dtype), whh_p.astype(weight_dtype),
            bi_p, bhn_p, wfc_p.astype(weight_dtype), bfc_p)


def gru_classifier(x, params, num_classes, *, batch_block=8, t_chunk=None):
    """x: (B, T, I) f32, batch_first (PyTorch layout). Returns (B, num_classes) f32."""
    wih_p, whh_p, bi_p, bhn_p, wfc_p, bfc_p = params
    B, T, I = x.shape
    HP = whh_p.shape[0]
    CP = wfc_p.shape[1]

    BB = batch_block
    if t_chunk is None:
        # Bound the per-chunk VMEM footprint for long sequences (fits v7x 64 MiB).
        t_chunk = T if T <= 64 else max(tc for tc in range(1, 65) if T % tc == 0)
    Tc = t_chunk
    assert T % Tc == 0, "t_chunk must divide T"

    B_pad = ((B + BB - 1) // BB) * BB
    x_p = jnp.pad(x.astype(jnp.float32), ((0, B_pad - B), (0, 0), (0, 0)))
    x_tm = jnp.transpose(x_p, (1, 0, 2))             # time-major (T, B_pad, I)

    grid = (B_pad // BB, T // Tc)                    # (parallel batch, sequential time)
    kernel = functools.partial(_gru_classifier_kernel, Tc=Tc, BB=BB, HP=HP)

    def resident(arr):      # full-extent block, fetched once, stays VMEM-resident
        return pl.BlockSpec(arr.shape, lambda bi, ti: (0,) * arr.ndim)

    out = pl.pallas_call(
        kernel,
        out_shape=jax.ShapeDtypeStruct((B_pad, CP), jnp.float32),
        grid_spec=pltpu.PrefetchScalarGridSpec(
            num_scalar_prefetch=0,
            grid=grid,
            in_specs=[
                pl.BlockSpec((Tc, BB, I), lambda bi, ti: (ti, bi, 0)),
                resident(wih_p), resident(whh_p), resident(bi_p),
                resident(bhn_p), resident(wfc_p), resident(bfc_p),
            ],
            out_specs=pl.BlockSpec((BB, CP), lambda bi, ti: (bi, 0)),
            scratch_shapes=[
                pltpu.VMEM((Tc, BB, 3 * HP), jnp.float32),   # hoisted gi, time-major
                pltpu.VMEM((BB, HP), jnp.float32),           # hidden state h
            ]),
        compiler_params=pltpu.CompilerParams(
            dimension_semantics=("parallel", "arbitrary"),
            vmem_limit_bytes=32 * 1024 * 1024),
    )(x_tm, wih_p, whh_p, bi_p, bhn_p, wfc_p, bfc_p)

    return out[:B, :num_classes]


def gru_classifier_ref(x, w_ih, w_hh, b_ih, b_hh, w_fc, b_fc):
    """Pure-JAX reference matching PyTorch nn.GRU(batch_first) + nn.Linear."""
    B, T, _ = x.shape
    H = w_hh.shape[1]
    h = jnp.zeros((B, H), jnp.float32)
    for t in range(T):
        x_t = x[:, t, :]
        gi = x_t @ w_ih.T + b_ih
        gh = h @ w_hh.T + b_hh
        r = jax.nn.sigmoid(gi[:, 0:H] + gh[:, 0:H])
        z = jax.nn.sigmoid(gi[:, H:2 * H] + gh[:, H:2 * H])
        n = jnp.tanh(gi[:, 2 * H:3 * H] + r * gh[:, 2 * H:3 * H])
        h = (1.0 - z) * n + z * h
    return h @ w_fc.T + b_fc


if __name__ == "__main__":
    B, T, I, H, C = 2, 8, 5, 64, 3

    key = jax.random.PRNGKey(0)
    keys = jax.random.split(key, 7)
    k = 1.0 / jnp.sqrt(jnp.float32(H))  # PyTorch default uniform(-1/sqrt(H), 1/sqrt(H))

    def u(kk, shape):
        return jax.random.uniform(kk, shape, jnp.float32, minval=-k, maxval=k)

    # PyTorch-layout parameters (gate order [r, z, n] along the 3H axis).
    w_ih = u(keys[0], (3 * H, I))
    w_hh = u(keys[1], (3 * H, H))
    b_ih = u(keys[2], (3 * H,))
    b_hh = u(keys[3], (3 * H,))
    w_fc = u(keys[4], (C, H))
    b_fc = u(keys[5], (C,))
    x = jax.random.normal(keys[6], (B, T, I), jnp.float32)

    ref = gru_classifier_ref(x, w_ih, w_hh, b_ih, b_hh, w_fc, b_fc)

    # f32-weight path: tight check of the kernel semantics.
    params_f32 = prepare_params(w_ih, w_hh, b_ih, b_hh, w_fc, b_fc,
                                weight_dtype=jnp.float32)
    out_f32 = jax.block_until_ready(gru_classifier(x, params_f32, C))
    assert out_f32.shape == (B, C)
    assert jnp.allclose(out_f32, ref, atol=2e-3, rtol=2e-3), (out_f32, ref)

    # bf16-weight path (default perf configuration for v6e/v7x MXU; activations
    # and accumulation stay f32, so v5e is also served).
    params_bf16 = prepare_params(w_ih, w_hh, b_ih, b_hh, w_fc, b_fc,
                                 weight_dtype=jnp.bfloat16)
    out_bf16 = jax.block_until_ready(gru_classifier(x, params_bf16, C))
    assert out_bf16.shape == (B, C)
    assert jnp.allclose(out_bf16, ref, atol=1e-2, rtol=1e-2), (out_bf16, ref)

    print("KERNEL_OK")
</pallas_src>

<mosaic_0001>
module attributes {stable_mosaic.version = 11 : i64} {
  func.func @_gru_classifier_kernel(%arg0: i32, %arg1: i32, %arg2: memref<8x8x5xf32, #tpu.memory_space<vmem>>, %arg3: memref<5x384xf32, #tpu.memory_space<vmem>>, %arg4: memref<128x384xf32, #tpu.memory_space<vmem>>, %arg5: memref<1x384xf32, #tpu.memory_space<vmem>>, %arg6: memref<1x128xf32, #tpu.memory_space<vmem>>, %arg7: memref<128x128xf32, #tpu.memory_space<vmem>>, %arg8: memref<1x128xf32, #tpu.memory_space<vmem>>, %arg9: memref<8x128xf32, #tpu.memory_space<vmem>>, %arg10: memref<8x8x384xf32, #tpu.memory_space<vmem>>, %arg11: memref<8x128xf32, #tpu.memory_space<vmem>>) attributes {dimension_semantics = [#tpu.dimension_semantics<parallel>, #tpu.dimension_semantics<arbitrary>], iteration_bounds = array<i64: 1, 1>, scalar_prefetch = 0 : i64, scratch_operands = 2 : i64, tpu.core_type = #tpu.core_type<tc>, window_params = [{transform_indices = @transform_0, window_bounds = array<i64: 8, 8, 5>}, {pipeline_mode = #tpu.pipeline_mode<synchronous>, transform_indices = @transform_1, window_bounds = array<i64: 5, 384>}, {pipeline_mode = #tpu.pipeline_mode<synchronous>, transform_indices = @transform_2, window_bounds = array<i64: 128, 384>}, {pipeline_mode = #tpu.pipeline_mode<synchronous>, transform_indices = @transform_3, window_bounds = array<i64: 1, 384>}, {pipeline_mode = #tpu.pipeline_mode<synchronous>, transform_indices = @transform_4, window_bounds = array<i64: 1, 128>}, {pipeline_mode = #tpu.pipeline_mode<synchronous>, transform_indices = @transform_5, window_bounds = array<i64: 128, 128>}, {pipeline_mode = #tpu.pipeline_mode<synchronous>, transform_indices = @transform_6, window_bounds = array<i64: 1, 128>}, {transform_indices = @transform_7, window_bounds = array<i64: 8, 128>}]} {
    %c0_i32 = arith.constant 0 : i32
    %0 = arith.cmpi eq, %arg1, %c0_i32 : i32
    %1 = arith.extui %0 : i1 to i32
    %c0_i32_0 = arith.constant 0 : i32
    %2 = arith.cmpi ne, %1, %c0_i32_0 : i32
    scf.if %2 {
      %cst_61 = arith.constant 0.000000e+00 : f32
      %259 = vector.broadcast %cst_61 : f32 to vector<8x128xf32>
      %c0_62 = arith.constant 0 : index
      %c0_63 = arith.constant 0 : index
      %260 = vector.load %arg11[%c0_62, %c0_63] : memref<8x128xf32, #tpu.memory_space<vmem>>, vector<8x128xf32>
      tpu.vector_store %arg11[%c0_62, %c0_63], %259 {strides = array<i32>} : memref<8x128xf32, #tpu.memory_space<vmem>>, vector<8x128xf32>,
    } else {
    }
    %c0 = arith.constant 0 : index
    %c0_1 = arith.constant 0 : index
    %c0_2 = arith.constant 0 : index
    %3 = vector.load %arg2[%c0, %c0_1, %c0_2] : memref<8x8x5xf32, #tpu.memory_space<vmem>>, vector<8x8x5xf32>
    %4 = vector.shape_cast %3 : vector<8x8x5xf32> to vector<64x5xf32>
    %c0_3 = arith.constant 0 : index
    %c0_4 = arith.constant 0 : index
    %5 = vector.load %arg3[%c0_3, %c0_4] : memref<5x384xf32, #tpu.memory_space<vmem>>, vector<5x384xf32>
    %cst = arith.constant dense<0.000000e+00> : vector<64x384xf32>
    %6 = tpu.matmul %4, %5, %cst {dimension_numbers = #tpu.dot_dimension_numbers<[1], [0], [0], [1], [0, 0, 1, 1], [], []>} : vector<64x5xf32>, vector<5x384xf32>, vector<64x384xf32> -> vector<64x384xf32>
    %c0_5 = arith.constant 0 : index
    %c0_6 = arith.constant 0 : index
    %7 = vector.load %arg5[%c0_5, %c0_6] : memref<1x384xf32, #tpu.memory_space<vmem>>, vector<1x384xf32>
    %8 = vector.broadcast %7 : vector<1x384xf32> to vector<64x384xf32>
    %9 = arith.addf %6, %8 : vector<64x384xf32>
    %10 = vector.shape_cast %9 : vector<64x384xf32> to vector<8x8x384xf32>
    %c0_7 = arith.constant 0 : index
    %c0_8 = arith.constant 0 : index
    %c0_9 = arith.constant 0 : index
    %11 = vector.load %arg10[%c0_7, %c0_8, %c0_9] : memref<8x8x384xf32, #tpu.memory_space<vmem>>, vector<8x8x384xf32>
    tpu.vector_store %arg10[%c0_7, %c0_8, %c0_9], %10 {strides = array<i32>} : memref<8x8x384xf32, #tpu.memory_space<vmem>>, vector<8x8x384xf32>,
    %c0_10 = arith.constant 0 : index
    %c0_11 = arith.constant 0 : index
    %12 = vector.load %arg4[%c0_10, %c0_11] : memref<128x384xf32, #tpu.memory_space<vmem>>, vector<128x384xf32>
    %c0_12 = arith.constant 0 : index
    %c0_13 = arith.constant 0 : index
    %13 = vector.load %arg6[%c0_12, %c0_13] : memref<1x128xf32, #tpu.memory_space<vmem>>, vector<1x128xf32>
    %c0_14 = arith.constant 0 : index
    %c0_15 = arith.constant 0 : index
    %14 = vector.load %arg11[%c0_14, %c0_15] : memref<8x128xf32, #tpu.memory_space<vmem>>, vector<8x128xf32>
    %c0_i32_16 = arith.constant 0 : i32
    %15 = arith.index_cast %c0_i32_16 : i32 to index
    %c0_17 = arith.constant 0 : index
    %c0_18 = arith.constant 0 : index
    %16 = vector.load %arg10[%15, %c0_17, %c0_18] : memref<8x8x384xf32, #tpu.memory_space<vmem>>, vector<1x8x384xf32>
    %17 = vector.shape_cast %16 : vector<1x8x384xf32> to vector<8x384xf32>
    %cst_19 = arith.constant dense<0.000000e+00> : vector<8x384xf32>
    %18 = tpu.matmul %14, %12, %cst_19 {dimension_numbers = #tpu.dot_dimension_numbers<[1], [0], [0], [1], [0, 0, 1, 1], [], []>} : vector<8x128xf32>, vector<128x384xf32>, vector<8x384xf32> -> vector<8x384xf32>
    %19 = vector.extract_strided_slice %17 {offsets = [0, 0], sizes = [8, 128], strides = [1, 1]} : vector<8x384xf32> to vector<8x128xf32>
    %20 = vector.extract_strided_slice %18 {offsets = [0, 0], sizes = [8, 128], strides = [1, 1]} : vector<8x384xf32> to vector<8x128xf32>
    %21 = arith.addf %19, %20 : vector<8x128xf32>
    %22 = arith.negf %21 : vector<8x128xf32>
    %23 = math.exp %22 : vector<8x128xf32>
    %cst_20 = arith.constant 1.000000e+00 : f32
    %24 = vector.broadcast %cst_20 : f32 to vector<8x128xf32>
    %25 = arith.addf %24, %23 : vector<8x128xf32>
    %26 = arith.divf %24, %25 : vector<8x128xf32>
    %27 = vector.extract_strided_slice %17 {offsets = [0, 128], sizes = [8, 128], strides = [1, 1]} : vector<8x384xf32> to vector<8x128xf32>
    %28 = vector.extract_strided_slice %18 {offsets = [0, 128], sizes = [8, 128], strides = [1, 1]} : vector<8x384xf32> to vector<8x128xf32>
    %29 = arith.addf %27, %28 : vector<8x128xf32>
    %30 = arith.negf %29 : vector<8x128xf32>
    %31 = math.exp %30 : vector<8x128xf32>
    %cst_21 = arith.constant 1.000000e+00 : f32
    %32 = vector.broadcast %cst_21 : f32 to vector<8x128xf32>
    %33 = arith.addf %32, %31 : vector<8x128xf32>
    %34 = arith.divf %32, %33 : vector<8x128xf32>
    %35 = vector.extract_strided_slice %17 {offsets = [0, 256], sizes = [8, 128], strides = [1, 1]} : vector<8x384xf32> to vector<8x128xf32>
    %36 = vector.extract_strided_slice %18 {offsets = [0, 256], sizes = [8, 128], strides = [1, 1]} : vector<8x384xf32> to vector<8x128xf32>
    %37 = vector.broadcast %13 : vector<1x128xf32> to vector<8x128xf32>
    %38 = arith.addf %36, %37 : vector<8x128xf32>
    %39 = arith.mulf %26, %38 : vector<8x128xf32>
    %40 = arith.addf %35, %39 : vector<8x128xf32>
    %41 = math.tanh %40 : vector<8x128xf32>
    %42 = arith.subf %14, %41 : vector<8x128xf32>
    %43 = arith.mulf %34, %42 : vector<8x128xf32>
    %44 = arith.addf %41, %43 : vector<8x128xf32>
    %c1_i32 = arith.constant 1 : i32
    %45 = arith.index_cast %c1_i32 : i32 to index
    %c0_22 = arith.constant 0 : index
    %c0_23 = arith.constant 0 : index
    %46 = vector.load %arg10[%45, %c0_22, %c0_23] : memref<8x8x384xf32, #tpu.memory_space<vmem>>, vector<1x8x384xf32>
    %47 = vector.shape_cast %46 : vector<1x8x384xf32> to vector<8x384xf32>
    %cst_24 = arith.constant dense<0.000000e+00> : vector<8x384xf32>
    %48 = tpu.matmul %44, %12, %cst_24 {dimension_numbers = #tpu.dot_dimension_numbers<[1], [0], [0], [1], [0, 0, 1, 1], [], []>} : vector<8x128xf32>, vector<128x384xf32>, vector<8x384xf32> -> vector<8x384xf32>
    %49 = vector.extract_strided_slice %47 {offsets = [0, 0], sizes = [8, 128], strides = [1, 1]} : vector<8x384xf32> to vector<8x128xf32>
    %50 = vector.extract_strided_slice %48 {offsets = [0, 0], sizes = [8, 128], strides = [1, 1]} : vector<8x384xf32> to vector<8x128xf32>
    %51 = arith.addf %49, %50 : vector<8x128xf32>
    %52 = arith.negf %51 : vector<8x128xf32>
    %53 = math.exp %52 : vector<8x128xf32>
    %cst_25 = arith.constant 1.000000e+00 : f32
    %54 = vector.broadcast %cst_25 : f32 to vector<8x128xf32>
    %55 = arith.addf %54, %53 : vector<8x128xf32>
    %56 = arith.divf %54, %55 : vector<8x128xf32>
    %57 = vector.extract_strided_slice %47 {offsets = [0, 128], sizes = [8, 128], strides = [1, 1]} : vector<8x384xf32> to vector<8x128xf32>
    %58 = vector.extract_strided_slice %48 {offsets = [0, 128], sizes = [8, 128], strides = [1, 1]} : vector<8x384xf32> to vector<8x128xf32>
    %59 = arith.addf %57, %58 : vector<8x128xf32>
    %60 = arith.negf %59 : vector<8x128xf32>
    %61 = math.exp %60 : vector<8x128xf32>
    %cst_26 = arith.constant 1.000000e+00 : f32
    %62 = vector.broadcast %cst_26 : f32 to vector<8x128xf32>
    %63 = arith.addf %62, %61 : vector<8x128xf32>
    %64 = arith.divf %62, %63 : vector<8x128xf32>
    %65 = vector.extract_strided_slice %47 {offsets = [0, 256], sizes = [8, 128], strides = [1, 1]} : vector<8x384xf32> to vector<8x128xf32>
    %66 = vector.extract_strided_slice %48 {offsets = [0, 256], sizes = [8, 128], strides = [1, 1]} : vector<8x384xf32> to vector<8x128xf32>
    %67 = vector.broadcast %13 : vector<1x128xf32> to vector<8x128xf32>
    %68 = arith.addf %66, %67 : vector<8x128xf32>
    %69 = arith.mulf %56, %68 : vector<8x128xf32>
    %70 = arith.addf %65, %69 : vector<8x128xf32>
    %71 = math.tanh %70 : vector<8x128xf32>
    %72 = arith.subf %44, %71 : vector<8x128xf32>
    %73 = arith.mulf %64, %72 : vector<8x128xf32>
    %74 = arith.addf %71, %73 : vector<8x128xf32>
    %c2_i32 = arith.constant 2 : i32
    %75 = arith.index_cast %c2_i32 : i32 to index
    %c0_27 = arith.constant 0 : index
    %c0_28 = arith.constant 0 : index
    %76 = vector.load %arg10[%75, %c0_27, %c0_28] : memref<8x8x384xf32, #tpu.memory_space<vmem>>, vector<1x8x384xf32>
    %77 = vector.shape_cast %76 : vector<1x8x384xf32> to vector<8x384xf32>
    %cst_29 = arith.constant dense<0.000000e+00> : vector<8x384xf32>
    %78 = tpu.matmul %74, %12, %cst_29 {dimension_numbers = #tpu.dot_dimension_numbers<[1], [0], [0], [1], [0, 0, 1, 1], [], []>} : vector<8x128xf32>, vector<128x384xf32>, vector<8x384xf32> -> vector<8x384xf32>
    %79 = vector.extract_strided_slice %77 {offsets = [0, 0], sizes = [8, 128], strides = [1, 1]} : vector<8x384xf32> to vector<8x128xf32>
    %80 = vector.extract_strided_slice %78 {offsets = [0, 0], sizes = [8, 128], strides = [1, 1]} : vector<8x384xf32> to vector<8x128xf32>
    %81 = arith.addf %79, %80 : vector<8x128xf32>
    %82 = arith.negf %81 : vector<8x128xf32>
    %83 = math.exp %82 : vector<8x128xf32>
    %cst_30 = arith.constant 1.000000e+00 : f32
    %84 = vector.broadcast %cst_30 : f32 to vector<8x128xf32>
    %85 = arith.addf %84, %83 : vector<8x128xf32>
    %86 = arith.divf %84, %85 : vector<8x128xf32>
    %87 = vector.extract_strided_slice %77 {offsets = [0, 128], sizes = [8, 128], strides = [1, 1]} : vector<8x384xf32> to vector<8x128xf32>
    %88 = vector.extract_strided_slice %78 {offsets = [0, 128], sizes = [8, 128], strides = [1, 1]} : vector<8x384xf32> to vector<8x128xf32>
    %89 = arith.addf %87, %88 : vector<8x128xf32>
    %90 = arith.negf %89 : vector<8x128xf32>
    %91 = math.exp %90 : vector<8x128xf32>
    %cst_31 = arith.constant 1.000000e+00 : f32
    %92 = vector.broadcast %cst_31 : f32 to vector<8x128xf32>
    %93 = arith.addf %92, %91 : vector<8x128xf32>
    %94 = arith.divf %92, %93 : vector<8x128xf32>
    %95 = vector.extract_strided_slice %77 {offsets = [0, 256], sizes = [8, 128], strides = [1, 1]} : vector<8x384xf32> to vector<8x128xf32>
    %96 = vector.extract_strided_slice %78 {offsets = [0, 256], sizes = [8, 128], strides = [1, 1]} : vector<8x384xf32> to vector<8x128xf32>
    %97 = vector.broadcast %13 : vector<1x128xf32> to vector<8x128xf32>
    %98 = arith.addf %96, %97 : vector<8x128xf32>
    %99 = arith.mulf %86, %98 : vector<8x128xf32>
    %100 = arith.addf %95, %99 : vector<8x128xf32>
    %101 = math.tanh %100 : vector<8x128xf32>
    %102 = arith.subf %74, %101 : vector<8x128xf32>
    %103 = arith.mulf %94, %102 : vector<8x128xf32>
    %104 = arith.addf %101, %103 : vector<8x128xf32>
    %c3_i32 = arith.constant 3 : i32
    %105 = arith.index_cast %c3_i32 : i32 to index
    %c0_32 = arith.constant 0 : index
    %c0_33 = arith.constant 0 : index
    %106 = vector.load %arg10[%105, %c0_32, %c0_33] : memref<8x8x384xf32, #tpu.memory_space<vmem>>, vector<1x8x384xf32>
    %107 = vector.shape_cast %106 : vector<1x8x384xf32> to vector<8x384xf32>
    %cst_34 = arith.constant dense<0.000000e+00> : vector<8x384xf32>
    %108 = tpu.matmul %104, %12, %cst_34 {dimension_numbers = #tpu.dot_dimension_numbers<[1], [0], [0], [1], [0, 0, 1, 1], [], []>} : vector<8x128xf32>, vector<128x384xf32>, vector<8x384xf32> -> vector<8x384xf32>
    %109 = vector.extract_strided_slice %107 {offsets = [0, 0], sizes = [8, 128], strides = [1, 1]} : vector<8x384xf32> to vector<8x128xf32>
    %110 = vector.extract_strided_slice %108 {offsets = [0, 0], sizes = [8, 128], strides = [1, 1]} : vector<8x384xf32> to vector<8x128xf32>
    %111 = arith.addf %109, %110 : vector<8x128xf32>
    %112 = arith.negf %111 : vector<8x128xf32>
    %113 = math.exp %112 : vector<8x128xf32>
    %cst_35 = arith.constant 1.000000e+00 : f32
    %114 = vector.broadcast %cst_35 : f32 to vector<8x128xf32>
    %115 = arith.addf %114, %113 : vector<8x128xf32>
    %116 = arith.divf %114, %115 : vector<8x128xf32>
    %117 = vector.extract_strided_slice %107 {offsets = [0, 128], sizes = [8, 128], strides = [1, 1]} : vector<8x384xf32> to vector<8x128xf32>
    %118 = vector.extract_strided_slice %108 {offsets = [0, 128], sizes = [8, 128], strides = [1, 1]} : vector<8x384xf32> to vector<8x128xf32>
    %119 = arith.addf %117, %118 : vector<8x128xf32>
    %120 = arith.negf %119 : vector<8x128xf32>
    %121 = math.exp %120 : vector<8x128xf32>
    %cst_36 = arith.constant 1.000000e+00 : f32
    %122 = vector.broadcast %cst_36 : f32 to vector<8x128xf32>
    %123 = arith.addf %122, %121 : vector<8x128xf32>
    %124 = arith.divf %122, %123 : vector<8x128xf32>
    %125 = vector.extract_strided_slice %107 {offsets = [0, 256], sizes = [8, 128], strides = [1, 1]} : vector<8x384xf32> to vector<8x128xf32>
    %126 = vector.extract_strided_slice %108 {offsets = [0, 256], sizes = [8, 128], strides = [1, 1]} : vector<8x384xf32> to vector<8x128xf32>
    %127 = vector.broadcast %13 : vector<1x128xf32> to vector<8x128xf32>
    %128 = arith.addf %126, %127 : vector<8x128xf32>
    %129 = arith.mulf %116, %128 : vector<8x128xf32>
    %130 = arith.addf %125, %129 : vector<8x128xf32>
    %131 = math.tanh %130 : vector<8x128xf32>
    %132 = arith.subf %104, %131 : vector<8x128xf32>
    %133 = arith.mulf %124, %132 : vector<8x128xf32>
    %134 = arith.addf %131, %133 : vector<8x128xf32>
    %c4_i32 = arith.constant 4 : i32
    %135 = arith.index_cast %c4_i32 : i32 to index
    %c0_37 = arith.constant 0 : index
    %c0_38 = arith.constant 0 : index
    %136 = vector.load %arg10[%135, %c0_37, %c0_38] : memref<8x8x384xf32, #tpu.memory_space<vmem>>, vector<1x8x384xf32>
    %137 = vector.shape_cast %136 : vector<1x8x384xf32> to vector<8x384xf32>
    %cst_39 = arith.constant dense<0.000000e+00> : vector<8x384xf32>
    %138 = tpu.matmul %134, %12, %cst_39 {dimension_numbers = #tpu.dot_dimension_numbers<[1], [0], [0], [1], [0, 0, 1, 1], [], []>} : vector<8x128xf32>, vector<128x384xf32>, vector<8x384xf32> -> vector<8x384xf32>
    %139 = vector.extract_strided_slice %137 {offsets = [0, 0], sizes = [8, 128], strides = [1, 1]} : vector<8x384xf32> to vector<8x128xf32>
    %140 = vector.extract_strided_slice %138 {offsets = [0, 0], sizes = [8, 128], strides = [1, 1]} : vector<8x384xf32> to vector<8x128xf32>
    %141 = arith.addf %139, %140 : vector<8x128xf32>
    %142 = arith.negf %141 : vector<8x128xf32>
    %143 = math.exp %142 : vector<8x128xf32>
    %cst_40 = arith.constant 1.000000e+00 : f32
    %144 = vector.broadcast %cst_40 : f32 to vector<8x128xf32>
    %145 = arith.addf %144, %143 : vector<8x128xf32>
    %146 = arith.divf %144, %145 : vector<8x128xf32>
    %147 = vector.extract_strided_slice %137 {offsets = [0, 128], sizes = [8, 128], strides = [1, 1]} : vector<8x384xf32> to vector<8x128xf32>
    %148 = vector.extract_strided_slice %138 {offsets = [0, 128], sizes = [8, 128], strides = [1, 1]} : vector<8x384xf32> to vector<8x128xf32>
    %149 = arith.addf %147, %148 : vector<8x128xf32>
    %150 = arith.negf %149 : vector<8x128xf32>
    %151 = math.exp %150 : vector<8x128xf32>
    %cst_41 = arith.constant 1.000000e+00 : f32
    %152 = vector.broadcast %cst_41 : f32 to vector<8x128xf32>
    %153 = arith.addf %152, %151 : vector<8x128xf32>
    %154 = arith.divf %152, %153 : vector<8x128xf32>
    %155 = vector.extract_strided_slice %137 {offsets = [0, 256], sizes = [8, 128], strides = [1, 1]} : vector<8x384xf32> to vector<8x128xf32>
    %156 = vector.extract_strided_slice %138 {offsets = [0, 256], sizes = [8, 128], strides = [1, 1]} : vector<8x384xf32> to vector<8x128xf32>
    %157 = vector.broadcast %13 : vector<1x128xf32> to vector<8x128xf32>
    %158 = arith.addf %156, %157 : vector<8x128xf32>
    %159 = arith.mulf %146, %158 : vector<8x128xf32>
    %160 = arith.addf %155, %159 : vector<8x128xf32>
    %161 = math.tanh %160 : vector<8x128xf32>
    %162 = arith.subf %134, %161 : vector<8x128xf32>
    %163 = arith.mulf %154, %162 : vector<8x128xf32>
    %164 = arith.addf %161, %163 : vector<8x128xf32>
    %c5_i32 = arith.constant 5 : i32
    %165 = arith.index_cast %c5_i32 : i32 to index
    %c0_42 = arith.constant 0 : index
    %c0_43 = arith.constant 0 : index
    %166 = vector.load %arg10[%165, %c0_42, %c0_43] : memref<8x8x384xf32, #tpu.memory_space<vmem>>, vector<1x8x384xf32>
    %167 = vector.shape_cast %166 : vector<1x8x384xf32> to vector<8x384xf32>
    %cst_44 = arith.constant dense<0.000000e+00> : vector<8x384xf32>
    %168 = tpu.matmul %164, %12, %cst_44 {dimension_numbers = #tpu.dot_dimension_numbers<[1], [0], [0], [1], [0, 0, 1, 1], [], []>} : vector<8x128xf32>, vector<128x384xf32>, vector<8x384xf32> -> vector<8x384xf32>
    %169 = vector.extract_strided_slice %167 {offsets = [0, 0], sizes = [8, 128], strides = [1, 1]} : vector<8x384xf32> to vector<8x128xf32>
    %170 = vector.extract_strided_slice %168 {offsets = [0, 0], sizes = [8, 128], strides = [1, 1]} : vector<8x384xf32> to vector<8x128xf32>
    %171 = arith.addf %169, %170 : vector<8x128xf32>
    %172 = arith.negf %171 : vector<8x128xf32>
    %173 = math.exp %172 : vector<8x128xf32>
    %cst_45 = arith.constant 1.000000e+00 : f32
    %174 = vector.broadcast %cst_45 : f32 to vector<8x128xf32>
    %175 = arith.addf %174, %173 : vector<8x128xf32>
    %176 = arith.divf %174, %175 : vector<8x128xf32>
    %177 = vector.extract_strided_slice %167 {offsets = [0, 128], sizes = [8, 128], strides = [1, 1]} : vector<8x384xf32> to vector<8x128xf32>
    %178 = vector.extract_strided_slice %168 {offsets = [0, 128], sizes = [8, 128], strides = [1, 1]} : vector<8x384xf32> to vector<8x128xf32>
    %179 = arith.addf %177, %178 : vector<8x128xf32>
    %180 = arith.negf %179 : vector<8x128xf32>
    %181 = math.exp %180 : vector<8x128xf32>
    %cst_46 = arith.constant 1.000000e+00 : f32
    %182 = vector.broadcast %cst_46 : f32 to vector<8x128xf32>
    %183 = arith.addf %182, %181 : vector<8x128xf32>
    %184 = arith.divf %182, %183 : vector<8x128xf32>
    %185 = vector.extract_strided_slice %167 {offsets = [0, 256], sizes = [8, 128], strides = [1, 1]} : vector<8x384xf32> to vector<8x128xf32>
    %186 = vector.extract_strided_slice %168 {offsets = [0, 256], sizes = [8, 128], strides = [1, 1]} : vector<8x384xf32> to vector<8x128xf32>
    %187 = vector.broadcast %13 : vector<1x128xf32> to vector<8x128xf32>
    %188 = arith.addf %186, %187 : vector<8x128xf32>
    %189 = arith.mulf %176, %188 : vector<8x128xf32>
    %190 = arith.addf %185, %189 : vector<8x128xf32>
    %191 = math.tanh %190 : vector<8x128xf32>
    %192 = arith.subf %164, %191 : vector<8x128xf32>
    %193 = arith.mulf %184, %192 : vector<8x128xf32>
    %194 = arith.addf %191, %193 : vector<8x128xf32>
    %c6_i32 = arith.constant 6 : i32
    %195 = arith.index_cast %c6_i32 : i32 to index
    %c0_47 = arith.constant 0 : index
    %c0_48 = arith.constant 0 : index
    %196 = vector.load %arg10[%195, %c0_47, %c0_48] : memref<8x8x384xf32, #tpu.memory_space<vmem>>, vector<1x8x384xf32>
    %197 = vector.shape_cast %196 : vector<1x8x384xf32> to vector<8x384xf32>
    %cst_49 = arith.constant dense<0.000000e+00> : vector<8x384xf32>
    %198 = tpu.matmul %194, %12, %cst_49 {dimension_numbers = #tpu.dot_dimension_numbers<[1], [0], [0], [1], [0, 0, 1, 1], [], []>} : vector<8x128xf32>, vector<128x384xf32>, vector<8x384xf32> -> vector<8x384xf32>
    %199 = vector.extract_strided_slice %197 {offsets = [0, 0], sizes = [8, 128], strides = [1, 1]} : vector<8x384xf32> to vector<8x128xf32>
    %200 = vector.extract_strided_slice %198 {offsets = [0, 0], sizes = [8, 128], strides = [1, 1]} : vector<8x384xf32> to vector<8x128xf32>
    %201 = arith.addf %199, %200 : vector<8x128xf32>
    %202 = arith.negf %201 : vector<8x128xf32>
    %203 = math.exp %202 : vector<8x128xf32>
    %cst_50 = arith.constant 1.000000e+00 : f32
    %204 = vector.broadcast %cst_50 : f32 to vector<8x128xf32>
    %205 = arith.addf %204, %203 : vector<8x128xf32>
    %206 = arith.divf %204, %205 : vector<8x128xf32>
    %207 = vector.extract_strided_slice %197 {offsets = [0, 128], sizes = [8, 128], strides = [1, 1]} : vector<8x384xf32> to vector<8x128xf32>
    %208 = vector.extract_strided_slice %198 {offsets = [0, 128], sizes = [8, 128], strides = [1, 1]} : vector<8x384xf32> to vector<8x128xf32>
    %209 = arith.addf %207, %208 : vector<8x128xf32>
    %210 = arith.negf %209 : vector<8x128xf32>
    %211 = math.exp %210 : vector<8x128xf32>
    %cst_51 = arith.constant 1.000000e+00 : f32
    %212 = vector.broadcast %cst_51 : f32 to vector<8x128xf32>
    %213 = arith.addf %212, %211 : vector<8x128xf32>
    %214 = arith.divf %212, %213 : vector<8x128xf32>
    %215 = vector.extract_strided_slice %197 {offsets = [0, 256], sizes = [8, 128], strides = [1, 1]} : vector<8x384xf32> to vector<8x128xf32>
    %216 = vector.extract_strided_slice %198 {offsets = [0, 256], sizes = [8, 128], strides = [1, 1]} : vector<8x384xf32> to vector<8x128xf32>
    %217 = vector.broadcast %13 : vector<1x128xf32> to vector<8x128xf32>
    %218 = arith.addf %216, %217 : vector<8x128xf32>
    %219 = arith.mulf %206, %218 : vector<8x128xf32>
    %220 = arith.addf %215, %219 : vector<8x128xf32>
    %221 = math.tanh %220 : vector<8x128xf32>
    %222 = arith.subf %194, %221 : vector<8x128xf32>
    %223 = arith.mulf %214, %222 : vector<8x128xf32>
    %224 = arith.addf %221, %223 : vector<8x128xf32>
    %c7_i32 = arith.constant 7 : i32
    %225 = arith.index_cast %c7_i32 : i32 to index
    %c0_52 = arith.constant 0 : index
    %c0_53 = arith.constant 0 : index
    %226 = vector.load %arg10[%225, %c0_52, %c0_53] : memref<8x8x384xf32, #tpu.memory_space<vmem>>, vector<1x8x384xf32>
    %227 = vector.shape_cast %226 : vector<1x8x384xf32> to vector<8x384xf32>
    %cst_54 = arith.constant dense<0.000000e+00> : vector<8x384xf32>
    %228 = tpu.matmul %224, %12, %cst_54 {dimension_numbers = #tpu.dot_dimension_numbers<[1], [0], [0], [1], [0, 0, 1, 1], [], []>} : vector<8x128xf32>, vector<128x384xf32>, vector<8x384xf32> -> vector<8x384xf32>
    %229 = vector.extract_strided_slice %227 {offsets = [0, 0], sizes = [8, 128], strides = [1, 1]} : vector<8x384xf32> to vector<8x128xf32>
    %230 = vector.extract_strided_slice %228 {offsets = [0, 0], sizes = [8, 128], strides = [1, 1]} : vector<8x384xf32> to vector<8x128xf32>
    %231 = arith.addf %229, %230 : vector<8x128xf32>
    %232 = arith.negf %231 : vector<8x128xf32>
    %233 = math.exp %232 : vector<8x128xf32>
    %cst_55 = arith.constant 1.000000e+00 : f32
    %234 = vector.broadcast %cst_55 : f32 to vector<8x128xf32>
    %235 = arith.addf %234, %233 : vector<8x128xf32>
    %236 = arith.divf %234, %235 : vector<8x128xf32>
    %237 = vector.extract_strided_slice %227 {offsets = [0, 128], sizes = [8, 128], strides = [1, 1]} : vector<8x384xf32> to vector<8x128xf32>
    %238 = vector.extract_strided_slice %228 {offsets = [0, 128], sizes = [8, 128], strides = [1, 1]} : vector<8x384xf32> to vector<8x128xf32>
    %239 = arith.addf %237, %238 : vector<8x128xf32>
    %240 = arith.negf %239 : vector<8x128xf32>
    %241 = math.exp %240 : vector<8x128xf32>
    %cst_56 = arith.constant 1.000000e+00 : f32
    %242 = vector.broadcast %cst_56 : f32 to vector<8x128xf32>
    %243 = arith.addf %242, %241 : vector<8x128xf32>
    %244 = arith.divf %242, %243 : vector<8x128xf32>
    %245 = vector.extract_strided_slice %227 {offsets = [0, 256], sizes = [8, 128], strides = [1, 1]} : vector<8x384xf32> to vector<8x128xf32>
    %246 = vector.extract_strided_slice %228 {offsets = [0, 256], sizes = [8, 128], strides = [1, 1]} : vector<8x384xf32> to vector<8x128xf32>
    %247 = vector.broadcast %13 : vector<1x128xf32> to vector<8x128xf32>
    %248 = arith.addf %246, %247 : vector<8x128xf32>
    %249 = arith.mulf %236, %248 : vector<8x128xf32>
    %250 = arith.addf %245, %249 : vector<8x128xf32>
    %251 = math.tanh %250 : vector<8x128xf32>
    %252 = arith.subf %224, %251 : vector<8x128xf32>
    %253 = arith.mulf %244, %252 : vector<8x128xf32>
    %254 = arith.addf %251, %253 : vector<8x128xf32>
    %c8_i32 = arith.constant 8 : i32
    %c0_57 = arith.constant 0 : index
    %c0_58 = arith.constant 0 : index
    %255 = vector.load %arg11[%c0_57, %c0_58] : memref<8x128xf32, #tpu.memory_space<vmem>>, vector<8x128xf32>
    tpu.vector_store %arg11[%c0_57, %c0_58], %254 {strides = array<i32>} : memref<8x128xf32, #tpu.memory_space<vmem>>, vector<8x128xf32>,
    %c0_i32_59 = arith.constant 0 : i32
    %256 = arith.cmpi eq, %arg1, %c0_i32_59 : i32
    %257 = arith.extui %256 : i1 to i32
    %c0_i32_60 = arith.constant 0 : i32
    %258 = arith.cmpi ne, %257, %c0_i32_60 : i32
    scf.if %258 {
      %c0_61 = arith.constant 0 : index
      %c0_62 = arith.constant 0 : index
      %259 = vector.load %arg7[%c0_61, %c0_62] : memref<128x128xf32, #tpu.memory_space<vmem>>, vector<128x128xf32>
      %cst_63 = arith.constant dense<0.000000e+00> : vector<8x128xf32>
      %260 = tpu.matmul %254, %259, %cst_63 {dimension_numbers = #tpu.dot_dimension_numbers<[1], [0], [0], [1], [0, 0, 1, 1], [], []>} : vector<8x128xf32>, vector<128x128xf32>, vector<8x128xf32> -> vector<8x128xf32>
      %c0_64 = arith.constant 0 : index
      %c0_65 = arith.constant 0 : index
      %261 = vector.load %arg8[%c0_64, %c0_65] : memref<1x128xf32, #tpu.memory_space<vmem>>, vector<1x128xf32>
      %262 = vector.broadcast %261 : vector<1x128xf32> to vector<8x128xf32>
      %263 = arith.addf %260, %262 : vector<8x128xf32>
      %c0_66 = arith.constant 0 : index
      %c0_67 = arith.constant 0 : index
      %264 = vector.load %arg9[%c0_66, %c0_67] : memref<8x128xf32, #tpu.memory_space<vmem>>, vector<8x128xf32>
      tpu.vector_store %arg9[%c0_66, %c0_67], %263 {strides = array<i32>} : memref<8x128xf32, #tpu.memory_space<vmem>>, vector<8x128xf32>,
    } else {
    }
    return
  }
  func.func @transform_0(%arg0: i32, %arg1: i32) -> (i32, i32, i32) {
    %c0_i32 = arith.constant 0 : i32
    %c0_i32_0 = arith.constant 0 : i32
    return %arg1, %arg0, %c0_i32 : i32, i32, i32
  }
  func.func @transform_1(%arg0: i32, %arg1: i32) -> (i32, i32) {
    %c0_i32 = arith.constant 0 : i32
    %c0_i32_0 = arith.constant 0 : i32
    %c0_i32_1 = arith.constant 0 : i32
    return %c0_i32, %c0_i32_0 : i32, i32
  }
  func.func @transform_2(%arg0: i32, %arg1: i32) -> (i32, i32) {
    %c0_i32 = arith.constant 0 : i32
    %c0_i32_0 = arith.constant 0 : i32
    %c0_i32_1 = arith.constant 0 : i32
    return %c0_i32, %c0_i32_0 : i32, i32
  }
  func.func @transform_3(%arg0: i32, %arg1: i32) -> (i32, i32) {
    %c0_i32 = arith.constant 0 : i32
    %c0_i32_0 = arith.constant 0 : i32
    %c0_i32_1 = arith.constant 0 : i32
    return %c0_i32, %c0_i32_0 : i32, i32
  }
  func.func @transform_4(%arg0: i32, %arg1: i32) -> (i32, i32) {
    %c0_i32 = arith.constant 0 : i32
    %c0_i32_0 = arith.constant 0 : i32
    %c0_i32_1 = arith.constant 0 : i32
    return %c0_i32, %c0_i32_0 : i32, i32
  }
  func.func @transform_5(%arg0: i32, %arg1: i32) -> (i32, i32) {
    %c0_i32 = arith.constant 0 : i32
    %c0_i32_0 = arith.constant 0 : i32
    %c0_i32_1 = arith.constant 0 : i32
    return %c0_i32, %c0_i32_0 : i32, i32
  }
  func.func @transform_6(%arg0: i32, %arg1: i32) -> (i32, i32) {
    %c0_i32 = arith.constant 0 : i32
    %c0_i32_0 = arith.constant 0 : i32
    %c0_i32_1 = arith.constant 0 : i32
    return %c0_i32, %c0_i32_0 : i32, i32
  }
  func.func @transform_7(%arg0: i32, %arg1: i32) -> (i32, i32) {
    %c0_i32 = arith.constant 0 : i32
    %c0_i32_0 = arith.constant 0 : i32
    return %arg0, %c0_i32 : i32, i32
  }
}

</mosaic_0001>

<llo_original>
// kernel: tpu_custom_call.1
$region0: #{tpu_custom_call.1}
  #allocation0 [shape = 'u32[]', space=smem, size = 0x4, offset = 0x4, fixed_abs, tag = 'smem constant byte address 0x4 - core index']
  #allocation1 [shape = 'u32[144,128]{1,0:T(1,128)}', space=vmem, size = 0x12000, scoped, tag = 'internal scratch']
  #allocation2 [shape = 'f32[8,8,384]{2,1,0:T(8,128)}', space=vmem, size = 0x18000, scoped, tag = 'scratch operand']
  #allocation3 [shape = 'f32[8,128]{1,0:T(8,128)}', space=vmem, size = 0x1000, scoped, tag = 'scratch operand']
  %s0 = inlined_call_operand.vmem [shape: f32[8,8,5], index: 0, kind: input, shape index: {}]
  %s1 = inlined_call_operand.vmem [shape: f32[5,384], index: 1, kind: input, shape index: {}]
  %s2 = inlined_call_operand.hbm [shape: f32[128,384], index: 2, kind: input, shape index: {}]
  %s3 = inlined_call_operand.vmem [shape: f32[1,384], index: 3, kind: input, shape index: {}]
  %s4 = inlined_call_operand.vmem [shape: f32[1,128], index: 4, kind: input, shape index: {}]
  %s5 = inlined_call_operand.hbm [shape: f32[128,128], index: 5, kind: input, shape index: {}]
  %s6 = inlined_call_operand.vmem [shape: f32[1,128], index: 6, kind: input, shape index: {}]
  %s7 = inlined_call_operand.hbm [shape: f32[8,128], index: 7, kind: output, shape index: {}]
  %s8 = sld [smem:[#allocation0]]
  $region54: #{tpu_custom_call.1} parent=0
    _
  %s10 = ssub.s32 1, %s8
  %s11 = scalar_select 0, %s10, %s8
  $region1: #{tpu_custom_call.1} parent=0
    #allocation4 [shape = 'u8[196608]{0}', space=vmem, size = 0x30000, scoped, tag = 'input window, operand 2, single buffered']
    #allocation5 [shape = 's32[1]{0}', space=sflag, size = 0x4, scoped, tag = 'scoped memory for tpu_custom_call.1']
    #allocation6 [shape = 's32[1]{0}', space=sflag, size = 0x4, scoped, tag = 'scoped memory for tpu_custom_call.1']
    #allocation7 [shape = 'u8[65536]{0}', space=vmem, size = 0x10000, scoped, tag = 'input window, operand 5, single buffered']
    #allocation8 [shape = 's32[1]{0}', space=sflag, size = 0x4, scoped, tag = 'scoped memory for tpu_custom_call.1']
    #allocation9 [shape = 'u8[4096]{0}', space=vmem, size = 0x1000, scoped, tag = 'output window, operand 0, single buffered']
    %12 = vsyncpa [#allocation5], 0
    %13 = vsyncpa [#allocation8], 0
    %14 = vsyncpa [#allocation6], 0
    // Predicated region
    $region2: #{tpu_custom_call.1} parent=1 // pred_check
      _
    $region3: #{tpu_custom_call.1} parent=1 // pred_check_branch
      %16 = sbr.rel (0) target = $region5
    $region4: #{tpu_custom_call.1} parent=1 // pred_region
      _
    $region5: #{tpu_custom_call.1} parent=1 // pred_fallthru
      _
    // Predicated region
    $region6: #{tpu_custom_call.1} parent=1 // pred_check
      _
    $region7: #{tpu_custom_call.1} parent=1 // pred_check_branch
      %18 = sbr.rel (0) target = $region9
    $region8: #{tpu_custom_call.1} parent=1 // pred_region
      _
    $region9: #{tpu_custom_call.1} parent=1 // pred_fallthru
      _
    // Predicated region
    $region10: #{tpu_custom_call.1} parent=1 // pred_check
      _
    $region11: #{tpu_custom_call.1} parent=1 // pred_check_branch
      %20 = sbr.rel (0) target = $region13
    $region12: #{tpu_custom_call.1} parent=1 // pred_region
      %s22 = ssub.s32 6144, 6144
      %23 = vsyncadd [#allocation5], %s22
      %s24 = sshll.u32 [#allocation4], 4
      %s25 = int_to_ptr.vmem [resolvable:$true] %s24
      %30 = dma.hbm_to_vmem [thread:$0]  %s2, 6144, %s25, [#allocation5], 384, 384, 24
    $region13: #{tpu_custom_call.1} parent=1 // pred_fallthru
      _
    // Predicated region
    $region14: #{tpu_custom_call.1} parent=1 // pred_check
      _
    $region15: #{tpu_custom_call.1} parent=1 // pred_check_branch
      %32 = sbr.rel (0) target = $region17
    $region16: #{tpu_custom_call.1} parent=1 // pred_region
      _
    $region17: #{tpu_custom_call.1} parent=1 // pred_fallthru
      _
    // Predicated region
    $region18: #{tpu_custom_call.1} parent=1 // pred_check
      _
    $region19: #{tpu_custom_call.1} parent=1 // pred_check_branch
      %34 = sbr.rel (0) target = $region21
    $region20: #{tpu_custom_call.1} parent=1 // pred_region
      _
    $region21: #{tpu_custom_call.1} parent=1 // pred_fallthru
      _
    // Predicated region
    $region22: #{tpu_custom_call.1} parent=1 // pred_check
      _
    $region23: #{tpu_custom_call.1} parent=1 // pred_check_branch
      %36 = sbr.rel (0) target = $region25
    $region24: #{tpu_custom_call.1} parent=1 // pred_region
      %s38 = ssub.s32 2048, 2048
      %39 = vsyncadd [#allocation8], %s38
      %s40 = sshll.u32 [#allocation7], 4
      %s41 = int_to_ptr.vmem [resolvable:$true] %s40
      %46 = dma.hbm_to_vmem [thread:$0]  %s5, 2048, %s41, [#allocation8], 128, 128, 8
    $region25: #{tpu_custom_call.1} parent=1 // pred_fallthru
      _
    // Predicated region
    $region26: #{tpu_custom_call.1} parent=1 // pred_check
      _
    $region27: #{tpu_custom_call.1} parent=1 // pred_check_branch
      %48 = sbr.rel (0) target = $region29
    $region28: #{tpu_custom_call.1} parent=1 // pred_region
      _
    $region29: #{tpu_custom_call.1} parent=1 // pred_fallthru
      _
    // Predicated region
    $region30: #{tpu_custom_call.1} parent=1 // pred_check
      _
    $region31: #{tpu_custom_call.1} parent=1 // pred_check_branch
      %50 = sbr.rel (0) target = $region33
    $region32: #{tpu_custom_call.1} parent=1 // pred_region
      %51 = dma.done [#allocation5], 6144
    $region33: #{tpu_custom_call.1} parent=1 // pred_fallthru
      _
    // Predicated region
    $region34: #{tpu_custom_call.1} parent=1 // pred_check
      _
    $region35: #{tpu_custom_call.1} parent=1 // pred_check_branch
      %53 = sbr.rel (0) target = $region37
    $region36: #{tpu_custom_call.1} parent=1 // pred_region
      %54 = dma.done [#allocation8], 2048
    $region37: #{tpu_custom_call.1} parent=1 // pred_fallthru
      _
    %p55 = scmp.eq.s32.totalorder 0, 0
    // Predicated region
    $region38: #{tpu_custom_call.1} parent=1 // pred_check
      %p56 = pneg %p55
    $region39: #{tpu_custom_call.1} parent=1 // pred_check_branch
      %58 = sbr.rel (%p56) target = $region41
    $region40: #{tpu_custom_call.1} parent=1 // pred_region
      %59 = vst [vmem:[#allocation3] sm:$0xff] 0.0
    $region41: #{tpu_custom_call.1} parent=1 // pred_fallthru
      _
    %v60 = vld [vmem:[%s0] sm:$0xff]
    %v61 = vld [vmem:[%s0 + $0x8] sm:$0xff]
    %v62 = vld [vmem:[%s0 + $0x10] sm:$0xff]
    %v63 = vld [vmem:[%s0 + $0x18] sm:$0xff]
    %v64 = vld [vmem:[%s0 + $0x20] sm:$0xff]
    %v65 = vld [vmem:[%s0 + $0x28] sm:$0xff]
    %v66 = vld [vmem:[%s0 + $0x30] sm:$0xff]
    %v67 = vld [vmem:[%s0 + $0x38] sm:$0xff]
    %v68 = vld [vmem:[%s1] sm:$0x1f]
    %v69 = vld [vmem:[%s1 + $0x8] sm:$0x1f]
    %v70 = vld [vmem:[%s1 + $0x10] sm:$0x1f]
    %v71 = vld [vmem:[%s3] sm:$0x7]
    %v73 = vlaneseq
    %v74 = vshrl.u32 %v73, 7
    %v75 = vsub.s32 0, %v74
    %v76 = vrot.slane %v71, %v75
    %v77 = vlaneseq
    %v78 = vshrl.u32 %v77, 7
    %v79 = vsub.s32 1, %v78
    %v80 = vrot.slane %v71, %v79
    %v81 = vlaneseq
    %v82 = vshrl.u32 %v81, 7
    %v83 = vsub.s32 2, %v82
    %v84 = vrot.slane %v71, %v83
    %vm88 = vcmask 39936
    %v90 = vsel %vm88, %v60, 0
    %v93 = vsel %vm88, %v61, 0
    %v96 = vsel %vm88, %v62, 0
    %v99 = vsel %vm88, %v63, 0
    %v102 = vsel %vm88, %v64, 0
    %v105 = vsel %vm88, %v65, 0
    %v108 = vsel %vm88, %v66, 0
    %v111 = vsel %vm88, %v67, 0
    %vm113 = vcmask 1044480
    %v115 = vsel %vm113, %v68, 0
    %v118 = vsel %vm113, %v69, 0
    %v121 = vsel %vm113, %v70, 0
    %123 = vmatprep.subr.mxu0 %v118
    %124 = vmatpush1.msra.mxu0 %v115
    %125 = vmatprep.subr.mxu0 0.0
    %126 = vmatpush1.msra.mxu0 0.0
    %127 = vmatprep.subr.mxu0 0.0
    %128 = vmatpush1.msra.mxu0 0.0
    %129 = vmatprep.subr.mxu0 0.0
    %130 = vmatpush1.msra.mxu0 0.0
    %131 = vmatprep.subr.mxu0 0.0
    %132 = vmatpush1.msra.mxu0 0.0
    %133 = vmatprep.subr.mxu0 0.0
    %134 = vmatpush1.msra.mxu0 0.0
    %135 = vmatprep.subr.mxu0 0.0
    %136 = vmatpush1.msra.mxu0 0.0
    %137 = vmatprep.subr.mxu0 0.0
    %138 = vmatpush1.msra.mxu0 0.0
    %139 = vmatprep.subr.mxu0 0.0
    %140 = vmatpush1.msra.mxu0 0.0
    %141 = vmatprep.subr.mxu0 0.0
    %142 = vmatpush1.msra.mxu0 0.0
    %143 = vmatprep.subr.mxu0 0.0
    %144 = vmatpush1.msra.mxu0 0.0
    %145 = vmatprep.subr.mxu0 0.0
    %146 = vmatpush1.msra.mxu0 0.0
    %147 = vmatprep.subr.mxu0 0.0
    %148 = vmatpush1.msra.mxu0 0.0
    %149 = vmatprep.subr.mxu0 0.0
    %150 = vmatpush1.msra.mxu0 0.0
    %151 = vmatprep.subr.mxu0 0.0
    %152 = vmatpush1.msra.mxu0 0.0
    %153 = vmatprep.subr.mxu0 0.0
    %154 = vmatpush1.msra.mxu0 0.0
    %155 = vmatprep.subr.mxu0 0.0
    %156 = vmatpush1.msra.mxu0 0.0
    %157 = vmatprep.subr.mxu0 0.0
    %158 = vmatpush1.msra.mxu0 0.0
    %159 = vmatprep.subr.mxu0 0.0
    %160 = vmatpush1.msra.mxu0 0.0
    %161 = vmatprep.subr.mxu0 0.0
    %162 = vmatpush1.msra.mxu0 0.0
    %163 = vmatprep.subr.mxu0 0.0
    %164 = vmatpush1.msra.mxu0 0.0
    %165 = vmatprep.subr.mxu0 0.0
    %166 = vmatpush1.msra.mxu0 0.0
    %167 = vmatprep.subr.mxu0 0.0
    %168 = vmatpush1.msra.mxu0 0.0
    %169 = vmatprep.subr.mxu0 0.0
    %170 = vmatpush1.msra.mxu0 0.0
    %171 = vmatprep.subr.mxu0 0.0
    %172 = vmatpush1.msra.mxu0 0.0
    %173 = vmatprep.subr.mxu0 0.0
    %174 = vmatpush1.msra.mxu0 0.0
    %175 = vmatprep.subr.mxu0 0.0
    %176 = vmatpush1.msra.mxu0 0.0
    %177 = vmatprep.subr.mxu0 0.0
    %178 = vmatpush1.msra.mxu0 0.0
    %179 = vmatprep.subr.mxu0 0.0
    %180 = vmatpush1.msra.mxu0 0.0
    %181 = vmatprep.subr.mxu0 0.0
    %182 = vmatpush1.msra.mxu0 0.0
    %183 = vmatprep.subr.mxu0 0.0
    %184 = vmatpush1.msra.mxu0 0.0
    %185 = vmatprep.subr.mxu0 0.0
    %186 = vmatpush1.msra.mxu0 0.0
    %187 = vmatprep.mubr.f32.mxu0 0.0
    %188 = vmatmul.mubr.f32.gmra.mrb[0].mxu0 %v90
    %v189 = vpop.f32.mrb[0].mxu0
    %v190 = vadd.f32 %v76, %v189
    %v191 = vpop.f32.mrb[0].mxu0
    %v192 = vadd.f32 %v80, %v191
    %193 = vmatprep.mubr.f32.mxu0 0.0
    %194 = vmatmul.mubr.f32.gmra.mrb[0].mxu0 %v93
    %v195 = vpop.f32.mrb[0].mxu0
    %v196 = vadd.f32 %v76, %v195
    %v197 = vpop.f32.mrb[0].mxu0
    %v198 = vadd.f32 %v80, %v197
    %199 = vmatprep.mubr.f32.mxu0 0.0
    %200 = vmatmul.mubr.f32.gmra.mrb[0].mxu0 %v96
    %v201 = vpop.f32.mrb[0].mxu0
    %v202 = vadd.f32 %v76, %v201
    %v203 = vpop.f32.mrb[0].mxu0
    %v204 = vadd.f32 %v80, %v203
    %205 = vmatprep.mubr.f32.mxu0 0.0
    %206 = vmatmul.mubr.f32.gmra.mrb[0].mxu0 %v99
    %v207 = vpop.f32.mrb[0].mxu0
    %v208 = vadd.f32 %v76, %v207
    %v209 = vpop.f32.mrb[0].mxu0
    %v210 = vadd.f32 %v80, %v209
    %211 = vmatprep.mubr.f32.mxu0 0.0
    %212 = vmatmul.mubr.f32.gmra.mrb[0].mxu0 %v102
    %v213 = vpop.f32.mrb[0].mxu0
    %v214 = vadd.f32 %v76, %v213
    %v215 = vpop.f32.mrb[0].mxu0
    %v216 = vadd.f32 %v80, %v215
    %217 = vmatprep.mubr.f32.mxu0 0.0
    %218 = vmatmul.mubr.f32.gmra.mrb[0].mxu0 %v105
    %v219 = vpop.f32.mrb[0].mxu0
    %v220 = vadd.f32 %v76, %v219
    %v221 = vpop.f32.mrb[0].mxu0
    %v222 = vadd.f32 %v80, %v221
    %223 = vmatprep.mubr.f32.mxu0 0.0
    %224 = vmatmul.mubr.f32.gmra.mrb[0].mxu0 %v108
    %v225 = vpop.f32.mrb[0].mxu0
    %v226 = vadd.f32 %v76, %v225
    %v227 = vpop.f32.mrb[0].mxu0
    %v228 = vadd.f32 %v80, %v227
    %229 = vmatprep.mubr.f32.mxu0 0.0
    %230 = vmatmul.mubr.f32.gmra.mrb[0].mxu0 %v111
    %v231 = vpop.f32.mrb[0].mxu0
    %v232 = vadd.f32 %v76, %v231
    %v233 = vpop.f32.mrb[0].mxu0
    %v234 = vadd.f32 %v80, %v233
    %235 = vdwg.mxu0
    %236 = vmatprep.subr.mxu0 0.0
    %237 = vmatpush1.msra.mxu0 %v121
    %238 = vmatprep.subr.mxu0 0.0
    %239 = vmatpush1.msra.mxu0 0.0
    %240 = vmatprep.subr.mxu0 0.0
    %241 = vmatpush1.msra.mxu0 0.0
    %242 = vmatprep.subr.mxu0 0.0
    %243 = vmatpush1.msra.mxu0 0.0
    %244 = vmatprep.subr.mxu0 0.0
    %245 = vmatpush1.msra.mxu0 0.0
    %246 = vmatprep.subr.mxu0 0.0
    %247 = vmatpush1.msra.mxu0 0.0
    %248 = vmatprep.subr.mxu0 0.0
    %249 = vmatpush1.msra.mxu0 0.0
    %250 = vmatprep.subr.mxu0 0.0
    %251 = vmatpush1.msra.mxu0 0.0
    %252 = vmatprep.subr.mxu0 0.0
    %253 = vmatpush1.msra.mxu0 0.0
    %254 = vmatprep.subr.mxu0 0.0
    %255 = vmatpush1.msra.mxu0 0.0
    %256 = vmatprep.subr.mxu0 0.0
    %257 = vmatpush1.msra.mxu0 0.0
    %258 = vmatprep.subr.mxu0 0.0
    %259 = vmatpush1.msra.mxu0 0.0
    %260 = vmatprep.subr.mxu0 0.0
    %261 = vmatpush1.msra.mxu0 0.0
    %262 = vmatprep.subr.mxu0 0.0
    %263 = vmatpush1.msra.mxu0 0.0
    %264 = vmatprep.subr.mxu0 0.0
    %265 = vmatpush1.msra.mxu0 0.0
    %266 = vmatprep.subr.mxu0 0.0
    %267 = vmatpush1.msra.mxu0 0.0
    %268 = vmatprep.subr.mxu0 0.0
    %269 = vmatpush1.msra.mxu0 0.0
    %270 = vmatprep.subr.mxu0 0.0
    %271 = vmatpush1.msra.mxu0 0.0
    %272 = vmatprep.subr.mxu0 0.0
    %273 = vmatpush1.msra.mxu0 0.0
    %274 = vmatprep.subr.mxu0 0.0
    %275 = vmatpush1.msra.mxu0 0.0
    %276 = vmatprep.subr.mxu0 0.0
    %277 = vmatpush1.msra.mxu0 0.0
    %278 = vmatprep.subr.mxu0 0.0
    %279 = vmatpush1.msra.mxu0 0.0
    %280 = vmatprep.subr.mxu0 0.0
    %281 = vmatpush1.msra.mxu0 0.0
    %282 = vmatprep.subr.mxu0 0.0
    %283 = vmatpush1.msra.mxu0 0.0
    %284 = vmatprep.subr.mxu0 0.0
    %285 = vmatpush1.msra.mxu0 0.0
    %286 = vmatprep.subr.mxu0 0.0
    %287 = vmatpush1.msra.mxu0 0.0
    %288 = vmatprep.subr.mxu0 0.0
    %289 = vmatpush1.msra.mxu0 0.0
    %290 = vmatprep.subr.mxu0 0.0
    %291 = vmatpush1.msra.mxu0 0.0
    %292 = vmatprep.subr.mxu0 0.0
    %293 = vmatpush1.msra.mxu0 0.0
    %294 = vmatprep.subr.mxu0 0.0
    %295 = vmatpush1.msra.mxu0 0.0
    %296 = vmatprep.subr.mxu0 0.0
    %297 = vmatpush1.msra.mxu0 0.0
    %298 = vmatprep.subr.mxu0 0.0
    %299 = vmatpush1.msra.mxu0 0.0
    %300 = vmatprep.mubr.f32.mxu0 0.0
    %301 = vmatmul.mubr.f32.gmra.mrb[0].mxu0 %v90
    %v302 = vpop.f32.mrb[0].mxu0
    %v303 = vadd.f32 %v84, %v302
    %v304 = vpop.f32.mrb[0].mxu0
    %305 = vmatprep.mubr.f32.mxu0 0.0
    %306 = vmatmul.mubr.f32.gmra.mrb[0].mxu0 %v93
    %v307 = vpop.f32.mrb[0].mxu0
    %v308 = vadd.f32 %v84, %v307
    %v309 = vpop.f32.mrb[0].mxu0
    %310 = vmatprep.mubr.f32.mxu0 0.0
    %311 = vmatmul.mubr.f32.gmra.mrb[0].mxu0 %v96
    %v312 = vpop.f32.mrb[0].mxu0
    %v313 = vadd.f32 %v84, %v312
    %v314 = vpop.f32.mrb[0].mxu0
    %315 = vmatprep.mubr.f32.mxu0 0.0
    %316 = vmatmul.mubr.f32.gmra.mrb[0].mxu0 %v99
    %v317 = vpop.f32.mrb[0].mxu0
    %v318 = vadd.f32 %v84, %v317
    %v319 = vpop.f32.mrb[0].mxu0
    %320 = vmatprep.mubr.f32.mxu0 0.0
    %321 = vmatmul.mubr.f32.gmra.mrb[0].mxu0 %v102
    %v322 = vpop.f32.mrb[0].mxu0
    %v323 = vadd.f32 %v84, %v322
    %v324 = vpop.f32.mrb[0].mxu0
    %325 = vmatprep.mubr.f32.mxu0 0.0
    %326 = vmatmul.mubr.f32.gmra.mrb[0].mxu0 %v105
    %v327 = vpop.f32.mrb[0].mxu0
    %v328 = vadd.f32 %v84, %v327
    %v329 = vpop.f32.mrb[0].mxu0
    %330 = vmatprep.mubr.f32.mxu0 0.0
    %331 = vmatmul.mubr.f32.gmra.mrb[0].mxu0 %v108
    %v332 = vpop.f32.mrb[0].mxu0
    %v333 = vadd.f32 %v84, %v332
    %v334 = vpop.f32.mrb[0].mxu0
    %335 = vmatprep.mubr.f32.mxu0 0.0
    %336 = vmatmul.mubr.f32.gmra.mrb[0].mxu0 %v111
    %v337 = vpop.f32.mrb[0].mxu0
    %v338 = vadd.f32 %v84, %v337
    %v339 = vpop.f32.mrb[0].mxu0
    %340 = vdwg.mxu0
    %341 = vst [vmem:[#allocation2] sm:$0xff] %v190
    %342 = vst [vmem:[#allocation2 + $0x8] sm:$0xff] %v192
    %343 = vst [vmem:[#allocation2 + $0x10] sm:$0xff] %v303
    %344 = vst [vmem:[#allocation2 + $0x18] sm:$0xff] %v196
    %345 = vst [vmem:[#allocation2 + $0x20] sm:$0xff] %v198
    %346 = vst [vmem:[#allocation2 + $0x28] sm:$0xff] %v308
    %347 = vst [vmem:[#allocation2 + $0x30] sm:$0xff] %v202
    %348 = vst [vmem:[#allocation2 + $0x38] sm:$0xff] %v204
    %349 = vst [vmem:[#allocation2 + $0x40] sm:$0xff] %v313
    %350 = vst [vmem:[#allocation2 + $0x48] sm:$0xff] %v208
    %351 = vst [vmem:[#allocation2 + $0x50] sm:$0xff] %v210
    %352 = vst [vmem:[#allocation2 + $0x58] sm:$0xff] %v318
    %353 = vst [vmem:[#allocation2 + $0x60] sm:$0xff] %v214
    %354 = vst [vmem:[#allocation2 + $0x68] sm:$0xff] %v216
    %355 = vst [vmem:[#allocation2 + $0x70] sm:$0xff] %v323
    %356 = vst [vmem:[#allocation2 + $0x78] sm:$0xff] %v220
    %357 = vst [vmem:[#allocation2 + $0x80] sm:$0xff] %v222
    %358 = vst [vmem:[#allocation2 + $0x88] sm:$0xff] %v328
    %359 = vst [vmem:[#allocation2 + $0x90] sm:$0xff] %v226
    %360 = vst [vmem:[#allocation2 + $0x98] sm:$0xff] %v228
    %361 = vst [vmem:[#allocation2 + $0xa0] sm:$0xff] %v333
    %362 = vst [vmem:[#allocation2 + $0xa8] sm:$0xff] %v232
    %363 = vst [vmem:[#allocation2 + $0xb0] sm:$0xff] %v234
    %364 = vst [vmem:[#allocation2 + $0xb8] sm:$0xff] %v338
    %v365 = vld [vmem:[#allocation4] sm:$0xff]
    %v366 = vld [vmem:[#allocation4 + $0x8] sm:$0xff]
    %v367 = vld [vmem:[#allocation4 + $0x10] sm:$0xff]
    %v368 = vld [vmem:[#allocation4 + $0x18] sm:$0xff]
    %v369 = vld [vmem:[#allocation4 + $0x20] sm:$0xff]
    %v370 = vld [vmem:[#allocation4 + $0x28] sm:$0xff]
    %v371 = vld [vmem:[#allocation4 + $0x30] sm:$0xff]
    %v372 = vld [vmem:[#allocation4 + $0x38] sm:$0xff]
    %v373 = vld [vmem:[#allocation4 + $0x40] sm:$0xff]
    %v374 = vld [vmem:[#allocation4 + $0x48] sm:$0xff]
    %v375 = vld [vmem:[#allocation4 + $0x50] sm:$0xff]
    %v376 = vld [vmem:[#allocation4 + $0x58] sm:$0xff]
    %v377 = vld [vmem:[#allocation4 + $0x60] sm:$0xff]
    %v378 = vld [vmem:[#allocation4 + $0x68] sm:$0xff]
    %v379 = vld [vmem:[#allocation4 + $0x70] sm:$0xff]
    %v380 = vld [vmem:[#allocation4 + $0x78] sm:$0xff]
    %v381 = vld [vmem:[#allocation4 + $0x80] sm:$0xff]
    %v382 = vld [vmem:[#allocation4 + $0x88] sm:$0xff]
    %v383 = vld [vmem:[#allocation4 + $0x90] sm:$0xff]
    %v384 = vld [vmem:[#allocation4 + $0x98] sm:$0xff]
    %v385 = vld [vmem:[#allocation4 + $0xa0] sm:$0xff]
    %v386 = vld [vmem:[#allocation4 + $0xa8] sm:$0xff]
    %v387 = vld [vmem:[#allocation4 + $0xb0] sm:$0xff]
    %v388 = vld [vmem:[#allocation4 + $0xb8] sm:$0xff]
    %v389 = vld [vmem:[#allocation4 + $0xc0] sm:$0xff]
    %v390 = vld [vmem:[#allocation4 + $0xc8] sm:$0xff]
    %v391 = vld [vmem:[#allocation4 + $0xd0] sm:$0xff]
    %v392 = vld [vmem:[#allocation4 + $0xd8] sm:$0xff]
    %v393 = vld [vmem:[#allocation4 + $0xe0] sm:$0xff]
    %v394 = vld [vmem:[#allocation4 + $0xe8] sm:$0xff]
    %v395 = vld [vmem:[#allocation4 + $0xf0] sm:$0xff]
    %v396 = vld [vmem:[#allocation4 + $0xf8] sm:$0xff]
    %v397 = vld [vmem:[#allocation4 + $0x100] sm:$0xff]
    %v398 = vld [vmem:[#allocation4 + $0x108] sm:$0xff]
    %v399 = vld [vmem:[#allocation4 + $0x110] sm:$0xff]
    %v400 = vld [vmem:[#allocation4 + $0x118] sm:$0xff]
    %v401 = vld [vmem:[#allocation4 + $0x120] sm:$0xff]
    %v402 = vld [vmem:[#allocation4 + $0x128] sm:$0xff]
    %v403 = vld [vmem:[#allocation4 + $0x130] sm:$0xff]
    %v404 = vld [vmem:[#allocation4 + $0x138] sm:$0xff]
    %v405 = vld [vmem:[#allocation4 + $0x140] sm:$0xff]
    %v406 = vld [vmem:[#allocation4 + $0x148] sm:$0xff]
    %v407 = vld [vmem:[#allocation4 + $0x150] sm:$0xff]
    %v408 = vld [vmem:[#allocation4 + $0x158] sm:$0xff]
    %v409 = vld [vmem:[#allocation4 + $0x160] sm:$0xff]
    %v410 = vld [vmem:[#allocation4 + $0x168] sm:$0xff]
    %v411 = vld [vmem:[#allocation4 + $0x170] sm:$0xff]
    %v412 = vld [vmem:[#allocation4 + $0x178] sm:$0xff]
    %v413 = vld [vmem:[%s4] sm:$0x1]
    %v414 = vld [vmem:[#allocation3] sm:$0xff]
    %v415 = vld [vmem:[#allocation2] sm:$0xff]
    %v416 = vld [vmem:[#allocation2 + $0x8] sm:$0xff]
    %v417 = vld [vmem:[#allocation2 + $0x10] sm:$0xff]
    %418 = vmatprep.subr.mxu0 %v366
    %419 = vmatpush1.msra.mxu0 %v365
    %420 = vmatprep.subr.mxu0 %v369
    %421 = vmatpush1.msra.mxu0 %v368
    %422 = vmatprep.subr.mxu0 %v372
    %423 = vmatpush1.msra.mxu0 %v371
    %424 = vmatprep.subr.mxu0 %v375
    %425 = vmatpush1.msra.mxu0 %v374
    %426 = vmatprep.subr.mxu0 %v378
    %427 = vmatpush1.msra.mxu0 %v377
    %428 = vmatprep.subr.mxu0 %v381
    %429 = vmatpush1.msra.mxu0 %v380
    %430 = vmatprep.subr.mxu0 %v384
    %431 = vmatpush1.msra.mxu0 %v383
    %432 = vmatprep.subr.mxu0 %v387
    %433 = vmatpush1.msra.mxu0 %v386
    %434 = vmatprep.subr.mxu0 %v390
    %435 = vmatpush1.msra.mxu0 %v389
    %436 = vmatprep.subr.mxu0 %v393
    %437 = vmatpush1.msra.mxu0 %v392
    %438 = vmatprep.subr.mxu0 %v396
    %439 = vmatpush1.msra.mxu0 %v395
    %440 = vmatprep.subr.mxu0 %v399
    %441 = vmatpush1.msra.mxu0 %v398
    %442 = vmatprep.subr.mxu0 %v402
    %443 = vmatpush1.msra.mxu0 %v401
    %444 = vmatprep.subr.mxu0 %v405
    %445 = vmatpush1.msra.mxu0 %v404
    %446 = vmatprep.subr.mxu0 %v408
    %447 = vmatpush1.msra.mxu0 %v407
    %448 = vmatprep.subr.mxu0 %v411
    %449 = vmatpush1.msra.mxu0 %v410
    %450 = vmatprep.subr.mxu0 0.0
    %451 = vmatpush1.msra.mxu0 0.0
    %452 = vmatprep.subr.mxu0 0.0
    %453 = vmatpush1.msra.mxu0 0.0
    %454 = vmatprep.subr.mxu0 0.0
    %455 = vmatpush1.msra.mxu0 0.0
    %456 = vmatprep.subr.mxu0 0.0
    %457 = vmatpush1.msra.mxu0 0.0
    %458 = vmatprep.subr.mxu0 0.0
    %459 = vmatpush1.msra.mxu0 0.0
    %460 = vmatprep.subr.mxu0 0.0
    %461 = vmatpush1.msra.mxu0 0.0
    %462 = vmatprep.subr.mxu0 0.0
    %463 = vmatpush1.msra.mxu0 0.0
    %464 = vmatprep.subr.mxu0 0.0
    %465 = vmatpush1.msra.mxu0 0.0
    %466 = vmatprep.subr.mxu0 0.0
    %467 = vmatpush1.msra.mxu0 0.0
    %468 = vmatprep.subr.mxu0 0.0
    %469 = vmatpush1.msra.mxu0 0.0
    %470 = vmatprep.subr.mxu0 0.0
    %471 = vmatpush1.msra.mxu0 0.0
    %472 = vmatprep.subr.mxu0 0.0
    %473 = vmatpush1.msra.mxu0 0.0
    %474 = vmatprep.subr.mxu0 0.0
    %475 = vmatpush1.msra.mxu0 0.0
    %476 = vmatprep.subr.mxu0 0.0
    %477 = vmatpush1.msra.mxu0 0.0
    %478 = vmatprep.subr.mxu0 0.0
    %479 = vmatpush1.msra.mxu0 0.0
    %480 = vmatprep.subr.mxu0 0.0
    %481 = vmatpush1.msra.mxu0 0.0
    %482 = vmatprep.mubr.f32.mxu0 0.0
    %483 = vmatmul.mubr.f32.gmra.mrb[0].mxu0 %v414
    %v484 = vpop.f32.mrb[0].mxu0
    %v485 = vadd.f32 0.0, %v484
    %v486 = vpop.f32.mrb[0].mxu0
    %v487 = vadd.f32 0.0, %v486
    %488 = vdwg.mxu0
    %489 = vmatprep.subr.mxu0 0.0
    %490 = vmatpush1.msra.mxu0 %v367
    %491 = vmatprep.subr.mxu0 0.0
    %492 = vmatpush1.msra.mxu0 %v370
    %493 = vmatprep.subr.mxu0 0.0
    %494 = vmatpush1.msra.mxu0 %v373
    %495 = vmatprep.subr.mxu0 0.0
    %496 = vmatpush1.msra.mxu0 %v376
    %497 = vmatprep.subr.mxu0 0.0
    %498 = vmatpush1.msra.mxu0 %v379
    %499 = vmatprep.subr.mxu0 0.0
    %500 = vmatpush1.msra.mxu0 %v382
    %501 = vmatprep.subr.mxu0 0.0
    %502 = vmatpush1.msra.mxu0 %v385
    %503 = vmatprep.subr.mxu0 0.0
    %504 = vmatpush1.msra.mxu0 %v388
    %505 = vmatprep.subr.mxu0 0.0
    %506 = vmatpush1.msra.mxu0 %v391
    %507 = vmatprep.subr.mxu0 0.0
    %508 = vmatpush1.msra.mxu0 %v394
    %509 = vmatprep.subr.mxu0 0.0
    %510 = vmatpush1.msra.mxu0 %v397
    %511 = vmatprep.subr.mxu0 0.0
    %512 = vmatpush1.msra.mxu0 %v400
    %513 = vmatprep.subr.mxu0 0.0
    %514 = vmatpush1.msra.mxu0 %v403
    %515 = vmatprep.subr.mxu0 0.0
    %516 = vmatpush1.msra.mxu0 %v406
    %517 = vmatprep.subr.mxu0 0.0
    %518 = vmatpush1.msra.mxu0 %v409
    %519 = vmatprep.subr.mxu0 0.0
    %520 = vmatpush1.msra.mxu0 %v412
    %521 = vmatprep.subr.mxu0 0.0
    %522 = vmatpush1.msra.mxu0 0.0
    %523 = vmatprep.subr.mxu0 0.0
    %524 = vmatpush1.msra.mxu0 0.0
    %525 = vmatprep.subr.mxu0 0.0
    %526 = vmatpush1.msra.mxu0 0.0
    %527 = vmatprep.subr.mxu0 0.0
    %528 = vmatpush1.msra.mxu0 0.0
    %529 = vmatprep.subr.mxu0 0.0
    %530 = vmatpush1.msra.mxu0 0.0
    %531 = vmatprep.subr.mxu0 0.0
    %532 = vmatpush1.msra.mxu0 0.0
    %533 = vmatprep.subr.mxu0 0.0
    %534 = vmatpush1.msra.mxu0 0.0
    %535 = vmatprep.subr.mxu0 0.0
    %536 = vmatpush1.msra.mxu0 0.0
    %537 = vmatprep.subr.mxu0 0.0
    %538 = vmatpush1.msra.mxu0 0.0
    %539 = vmatprep.subr.mxu0 0.0
    %540 = vmatpush1.msra.mxu0 0.0
    %541 = vmatprep.subr.mxu0 0.0
    %542 = vmatpush1.msra.mxu0 0.0
    %543 = vmatprep.subr.mxu0 0.0
    %544 = vmatpush1.msra.mxu0 0.0
    %545 = vmatprep.subr.mxu0 0.0
    %546 = vmatpush1.msra.mxu0 0.0
    %547 = vmatprep.subr.mxu0 0.0
    %548 = vmatpush1.msra.mxu0 0.0
    %549 = vmatprep.subr.mxu0 0.0
    %550 = vmatpush1.msra.mxu0 0.0
    %551 = vmatprep.subr.mxu0 0.0
    %552 = vmatpush1.msra.mxu0 0.0
    %553 = vmatprep.mubr.f32.mxu0 0.0
    %554 = vmatmul.mubr.f32.gmra.mrb[0].mxu0 %v414
    %v555 = vpop.f32.mrb[0].mxu0
    %v556 = vadd.f32 0.0, %v555
    %v557 = vpop.f32.mrb[0].mxu0
    %558 = vdwg.mxu0
    %v559 = vadd.f32 %v415, %v485
    %v560 = vxor.u32 %v559, 2147483648
    %v561 = vmul.f32 %v560, 1.442695
    %v562 = vpow.pop %v561
    %v563 = vadd.f32 %v562, 1.0
    %v564 = vrcp.pop %v563
    %v565 = vmul.f32 1.0, %v564
    %v566 = vadd.f32 %v416, %v487
    %v567 = vxor.u32 %v566, 2147483648
    %v568 = vmul.f32 %v567, 1.442695
    %v569 = vpow.pop %v568
    %v570 = vadd.f32 %v569, 1.0
    %v571 = vrcp.pop %v570
    %v572 = vmul.f32 1.0, %v571
    %v574 = vlaneseq
    %v575 = vshrl.u32 %v574, 7
    %v576 = vsub.s32 0, %v575
    %v577 = vrot.slane %v413, %v576
    %v579 = vadd.f32 %v556, %v577
    %v580 = vmul.f32 %v565, %v579
    %v581 = vadd.f32 %v417, %v580
    %v582 = vtanh.pop %v581
    %v583 = vsub.f32 %v414, %v582
    %v584 = vmul.f32 %v572, %v583
    %v585 = vadd.f32 %v582, %v584
    %s586 = scalar_lea.vmem [#allocation2], 24
    %v587 = vld [vmem:[%s586] sm:$0xff]
    %v588 = vld [vmem:[%s586 + $0x8] sm:$0xff]
    %v589 = vld [vmem:[%s586 + $0x10] sm:$0xff]
    %590 = vmatprep.subr.mxu0 %v366
    %591 = vmatpush1.msra.mxu0 %v365
    %592 = vmatprep.subr.mxu0 %v369
    %593 = vmatpush1.msra.mxu0 %v368
    %594 = vmatprep.subr.mxu0 %v372
    %595 = vmatpush1.msra.mxu0 %v371
    %596 = vmatprep.subr.mxu0 %v375
    %597 = vmatpush1.msra.mxu0 %v374
    %598 = vmatprep.subr.mxu0 %v378
    %599 = vmatpush1.msra.mxu0 %v377
    %600 = vmatprep.subr.mxu0 %v381
    %601 = vmatpush1.msra.mxu0 %v380
    %602 = vmatprep.subr.mxu0 %v384
    %603 = vmatpush1.msra.mxu0 %v383
    %604 = vmatprep.subr.mxu0 %v387
    %605 = vmatpush1.msra.mxu0 %v386
    %606 = vmatprep.subr.mxu0 %v390
    %607 = vmatpush1.msra.mxu0 %v389
    %608 = vmatprep.subr.mxu0 %v393
    %609 = vmatpush1.msra.mxu0 %v392
    %610 = vmatprep.subr.mxu0 %v396
    %611 = vmatpush1.msra.mxu0 %v395
    %612 = vmatprep.subr.mxu0 %v399
    %613 = vmatpush1.msra.mxu0 %v398
    %614 = vmatprep.subr.mxu0 %v402
    %615 = vmatpush1.msra.mxu0 %v401
    %616 = vmatprep.subr.mxu0 %v405
    %617 = vmatpush1.msra.mxu0 %v404
    %618 = vmatprep.subr.mxu0 %v408
    %619 = vmatpush1.msra.mxu0 %v407
    %620 = vmatprep.subr.mxu0 %v411
    %621 = vmatpush1.msra.mxu0 %v410
    %622 = vmatprep.subr.mxu0 0.0
    %623 = vmatpush1.msra.mxu0 0.0
    %624 = vmatprep.subr.mxu0 0.0
    %625 = vmatpush1.msra.mxu0 0.0
    %626 = vmatprep.subr.mxu0 0.0
    %627 = vmatpush1.msra.mxu0 0.0
    %628 = vmatprep.subr.mxu0 0.0
    %629 = vmatpush1.msra.mxu0 0.0
    %630 = vmatprep.subr.mxu0 0.0
    %631 = vmatpush1.msra.mxu0 0.0
    %632 = vmatprep.subr.mxu0 0.0
    %633 = vmatpush1.msra.mxu0 0.0
    %634 = vmatprep.subr.mxu0 0.0
    %635 = vmatpush1.msra.mxu0 0.0
    %636 = vmatprep.subr.mxu0 0.0
    %637 = vmatpush1.msra.mxu0 0.0
    %638 = vmatprep.subr.mxu0 0.0
    %639 = vmatpush1.msra.mxu0 0.0
    %640 = vmatprep.subr.mxu0 0.0
    %641 = vmatpush1.msra.mxu0 0.0
    %642 = vmatprep.subr.mxu0 0.0
    %643 = vmatpush1.msra.mxu0 0.0
    %644 = vmatprep.subr.mxu0 0.0
    %645 = vmatpush1.msra.mxu0 0.0
    %646 = vmatprep.subr.mxu0 0.0
    %647 = vmatpush1.msra.mxu0 0.0
    %648 = vmatprep.subr.mxu0 0.0
    %649 = vmatpush1.msra.mxu0 0.0
    %650 = vmatprep.subr.mxu0 0.0
    %651 = vmatpush1.msra.mxu0 0.0
    %652 = vmatprep.subr.mxu0 0.0
    %653 = vmatpush1.msra.mxu0 0.0
    %654 = vmatprep.mubr.f32.mxu0 0.0
    %655 = vmatmul.mubr.f32.gmra.mrb[0].mxu0 %v585
    %v656 = vpop.f32.mrb[0].mxu0
    %v657 = vadd.f32 0.0, %v656
    %v658 = vpop.f32.mrb[0].mxu0
    %v659 = vadd.f32 0.0, %v658
    %660 = vdwg.mxu0
    %661 = vmatprep.subr.mxu0 0.0
    %662 = vmatpush1.msra.mxu0 %v367
    %663 = vmatprep.subr.mxu0 0.0
    %664 = vmatpush1.msra.mxu0 %v370
    %665 = vmatprep.subr.mxu0 0.0
    %666 = vmatpush1.msra.mxu0 %v373
    %667 = vmatprep.subr.mxu0 0.0
    %668 = vmatpush1.msra.mxu0 %v376
    %669 = vmatprep.subr.mxu0 0.0
    %670 = vmatpush1.msra.mxu0 %v379
    %671 = vmatprep.subr.mxu0 0.0
    %672 = vmatpush1.msra.mxu0 %v382
    %673 = vmatprep.subr.mxu0 0.0
    %674 = vmatpush1.msra.mxu0 %v385
    %675 = vmatprep.subr.mxu0 0.0
    %676 = vmatpush1.msra.mxu0 %v388
    %677 = vmatprep.subr.mxu0 0.0
    %678 = vmatpush1.msra.mxu0 %v391
    %679 = vmatprep.subr.mxu0 0.0
    %680 = vmatpush1.msra.mxu0 %v394
    %681 = vmatprep.subr.mxu0 0.0
    %682 = vmatpush1.msra.mxu0 %v397
    %683 = vmatprep.subr.mxu0 0.0
    %684 = vmatpush1.msra.mxu0 %v400
    %685 = vmatprep.subr.mxu0 0.0
    %686 = vmatpush1.msra.mxu0 %v403
    %687 = vmatprep.subr.mxu0 0.0
    %688 = vmatpush1.msra.mxu0 %v406
    %689 = vmatprep.subr.mxu0 0.0
    %690 = vmatpush1.msra.mxu0 %v409
    %691 = vmatprep.subr.mxu0 0.0
    %692 = vmatpush1.msra.mxu0 %v412
    %693 = vmatprep.subr.mxu0 0.0
    %694 = vmatpush1.msra.mxu0 0.0
    %695 = vmatprep.subr.mxu0 0.0
    %696 = vmatpush1.msra.mxu0 0.0
    %697 = vmatprep.subr.mxu0 0.0
    %698 = vmatpush1.msra.mxu0 0.0
    %699 = vmatprep.subr.mxu0 0.0
    %700 = vmatpush1.msra.mxu0 0.0
    %701 = vmatprep.subr.mxu0 0.0
    %702 = vmatpush1.msra.mxu0 0.0
    %703 = vmatprep.subr.mxu0 0.0
    %704 = vmatpush1.msra.mxu0 0.0
    %705 = vmatprep.subr.mxu0 0.0
    %706 = vmatpush1.msra.mxu0 0.0
    %707 = vmatprep.subr.mxu0 0.0
    %708 = vmatpush1.msra.mxu0 0.0
    %709 = vmatprep.subr.mxu0 0.0
    %710 = vmatpush1.msra.mxu0 0.0
    %711 = vmatprep.subr.mxu0 0.0
    %712 = vmatpush1.msra.mxu0 0.0
    %713 = vmatprep.subr.mxu0 0.0
    %714 = vmatpush1.msra.mxu0 0.0
    %715 = vmatprep.subr.mxu0 0.0
    %716 = vmatpush1.msra.mxu0 0.0
    %717 = vmatprep.subr.mxu0 0.0
    %718 = vmatpush1.msra.mxu0 0.0
    %719 = vmatprep.subr.mxu0 0.0
    %720 = vmatpush1.msra.mxu0 0.0
    %721 = vmatprep.subr.mxu0 0.0
    %722 = vmatpush1.msra.mxu0 0.0
    %723 = vmatprep.subr.mxu0 0.0
    %724 = vmatpush1.msra.mxu0 0.0
    %725 = vmatprep.mubr.f32.mxu0 0.0
    %726 = vmatmul.mubr.f32.gmra.mrb[0].mxu0 %v585
    %v727 = vpop.f32.mrb[0].mxu0
    %v728 = vadd.f32 0.0, %v727
    %v729 = vpop.f32.mrb[0].mxu0
    %730 = vdwg.mxu0
    %v731 = vadd.f32 %v587, %v657
    %v732 = vxor.u32 %v731, 2147483648
    %v733 = vmul.f32 %v732, 1.442695
    %v734 = vpow.pop %v733
    %v735 = vadd.f32 %v734, 1.0
    %v736 = vrcp.pop %v735
    %v737 = vmul.f32 1.0, %v736
    %v738 = vadd.f32 %v588, %v659
    %v739 = vxor.u32 %v738, 2147483648
    %v740 = vmul.f32 %v739, 1.442695
    %v741 = vpow.pop %v740
    %v742 = vadd.f32 %v741, 1.0
    %v743 = vrcp.pop %v742
    %v744 = vmul.f32 1.0, %v743
    %v745 = vadd.f32 %v728, %v577
    %v746 = vmul.f32 %v737, %v745
    %v747 = vadd.f32 %v589, %v746
    %v748 = vtanh.pop %v747
    %v749 = vsub.f32 %v585, %v748
    %v750 = vmul.f32 %v744, %v749
    %v751 = vadd.f32 %v748, %v750
    %s752 = scalar_lea.vmem [#allocation2], 48
    %v753 = vld [vmem:[%s752] sm:$0xff]
    %v754 = vld [vmem:[%s752 + $0x8] sm:$0xff]
    %v755 = vld [vmem:[%s752 + $0x10] sm:$0xff]
    %756 = vmatprep.subr.mxu0 %v366
    %757 = vmatpush1.msra.mxu0 %v365
    %758 = vmatprep.subr.mxu0 %v369
    %759 = vmatpush1.msra.mxu0 %v368
    %760 = vmatprep.subr.mxu0 %v372
    %761 = vmatpush1.msra.mxu0 %v371
    %762 = vmatprep.subr.mxu0 %v375
    %763 = vmatpush1.msra.mxu0 %v374
    %764 = vmatprep.subr.mxu0 %v378
    %765 = vmatpush1.msra.mxu0 %v377
    %766 = vmatprep.subr.mxu0 %v381
    %767 = vmatpush1.msra.mxu0 %v380
    %768 = vmatprep.subr.mxu0 %v384
    %769 = vmatpush1.msra.mxu0 %v383
    %770 = vmatprep.subr.mxu0 %v387
    %771 = vmatpush1.msra.mxu0 %v386
    %772 = vmatprep.subr.mxu0 %v390
    %773 = vmatpush1.msra.mxu0 %v389
    %774 = vmatprep.subr.mxu0 %v393
    %775 = vmatpush1.msra.mxu0 %v392
    %776 = vmatprep.subr.mxu0 %v396
    %777 = vmatpush1.msra.mxu0 %v395
    %778 = vmatprep.subr.mxu0 %v399
    %779 = vmatpush1.msra.mxu0 %v398
    %780 = vmatprep.subr.mxu0 %v402
    %781 = vmatpush1.msra.mxu0 %v401
    %782 = vmatprep.subr.mxu0 %v405
    %783 = vmatpush1.msra.mxu0 %v404
    %784 = vmatprep.subr.mxu0 %v408
    %785 = vmatpush1.msra.mxu0 %v407
    %786 = vmatprep.subr.mxu0 %v411
    %787 = vmatpush1.msra.mxu0 %v410
    %788 = vmatprep.subr.mxu0 0.0
    %789 = vmatpush1.msra.mxu0 0.0
    %790 = vmatprep.subr.mxu0 0.0
    %791 = vmatpush1.msra.mxu0 0.0
    %792 = vmatprep.subr.mxu0 0.0
    %793 = vmatpush1.msra.mxu0 0.0
    %794 = vmatprep.subr.mxu0 0.0
    %795 = vmatpush1.msra.mxu0 0.0
    %796 = vmatprep.subr.mxu0 0.0
    %797 = vmatpush1.msra.mxu0 0.0
    %798 = vmatprep.subr.mxu0 0.0
    %799 = vmatpush1.msra.mxu0 0.0
    %800 = vmatprep.subr.mxu0 0.0
    %801 = vmatpush1.msra.mxu0 0.0
    %802 = vmatprep.subr.mxu0 0.0
    %803 = vmatpush1.msra.mxu0 0.0
    %804 = vmatprep.subr.mxu0 0.0
    %805 = vmatpush1.msra.mxu0 0.0
    %806 = vmatprep.subr.mxu0 0.0
    %807 = vmatpush1.msra.mxu0 0.0
    %808 = vmatprep.subr.mxu0 0.0
    %809 = vmatpush1.msra.mxu0 0.0
    %810 = vmatprep.subr.mxu0 0.0
    %811 = vmatpush1.msra.mxu0 0.0
    %812 = vmatprep.subr.mxu0 0.0
    %813 = vmatpush1.msra.mxu0 0.0
    %814 = vmatprep.subr.mxu0 0.0
    %815 = vmatpush1.msra.mxu0 0.0
    %816 = vmatprep.subr.mxu0 0.0
    %817 = vmatpush1.msra.mxu0 0.0
    %818 = vmatprep.subr.mxu0 0.0
    %819 = vmatpush1.msra.mxu0 0.0
    %820 = vmatprep.mubr.f32.mxu0 0.0
    %821 = vmatmul.mubr.f32.gmra.mrb[0].mxu0 %v751
    %v822 = vpop.f32.mrb[0].mxu0
    %v823 = vadd.f32 0.0, %v822
    %v824 = vpop.f32.mrb[0].mxu0
    %v825 = vadd.f32 0.0, %v824
    %826 = vdwg.mxu0
    %827 = vmatprep.subr.mxu0 0.0
    %828 = vmatpush1.msra.mxu0 %v367
    %829 = vmatprep.subr.mxu0 0.0
    %830 = vmatpush1.msra.mxu0 %v370
    %831 = vmatprep.subr.mxu0 0.0
    %832 = vmatpush1.msra.mxu0 %v373
    %833 = vmatprep.subr.mxu0 0.0
    %834 = vmatpush1.msra.mxu0 %v376
    %835 = vmatprep.subr.mxu0 0.0
    %836 = vmatpush1.msra.mxu0 %v379
    %837 = vmatprep.subr.mxu0 0.0
    %838 = vmatpush1.msra.mxu0 %v382
    %839 = vmatprep.subr.mxu0 0.0
    %840 = vmatpush1.msra.mxu0 %v385
    %841 = vmatprep.subr.mxu0 0.0
    %842 = vmatpush1.msra.mxu0 %v388
    %843 = vmatprep.subr.mxu0 0.0
    %844 = vmatpush1.msra.mxu0 %v391
    %845 = vmatprep.subr.mxu0 0.0
    %846 = vmatpush1.msra.mxu0 %v394
    %847 = vmatprep.subr.mxu0 0.0
    %848 = vmatpush1.msra.mxu0 %v397
    %849 = vmatprep.subr.mxu0 0.0
    %850 = vmatpush1.msra.mxu0 %v400
    %851 = vmatprep.subr.mxu0 0.0
    %852 = vmatpush1.msra.mxu0 %v403
    %853 = vmatprep.subr.mxu0 0.0
    %854 = vmatpush1.msra.mxu0 %v406
    %855 = vmatprep.subr.mxu0 0.0
    %856 = vmatpush1.msra.mxu0 %v409
    %857 = vmatprep.subr.mxu0 0.0
    %858 = vmatpush1.msra.mxu0 %v412
    %859 = vmatprep.subr.mxu0 0.0
    %860 = vmatpush1.msra.mxu0 0.0
    %861 = vmatprep.subr.mxu0 0.0
    %862 = vmatpush1.msra.mxu0 0.0
    %863 = vmatprep.subr.mxu0 0.0
    %864 = vmatpush1.msra.mxu0 0.0
    %865 = vmatprep.subr.mxu0 0.0
    %866 = vmatpush1.msra.mxu0 0.0
    %867 = vmatprep.subr.mxu0 0.0
    %868 = vmatpush1.msra.mxu0 0.0
    %869 = vmatprep.subr.mxu0 0.0
    %870 = vmatpush1.msra.mxu0 0.0
    %871 = vmatprep.subr.mxu0 0.0
    %872 = vmatpush1.msra.mxu0 0.0
    %873 = vmatprep.subr.mxu0 0.0
    %874 = vmatpush1.msra.mxu0 0.0
    %875 = vmatprep.subr.mxu0 0.0
    %876 = vmatpush1.msra.mxu0 0.0
    %877 = vmatprep.subr.mxu0 0.0
    %878 = vmatpush1.msra.mxu0 0.0
    %879 = vmatprep.subr.mxu0 0.0
    %880 = vmatpush1.msra.mxu0 0.0
    %881 = vmatprep.subr.mxu0 0.0
    %882 = vmatpush1.msra.mxu0 0.0
    %883 = vmatprep.subr.mxu0 0.0
    %884 = vmatpush1.msra.mxu0 0.0
    %885 = vmatprep.subr.mxu0 0.0
    %886 = vmatpush1.msra.mxu0 0.0
    %887 = vmatprep.subr.mxu0 0.0
    %888 = vmatpush1.msra.mxu0 0.0
    %889 = vmatprep.subr.mxu0 0.0
    %890 = vmatpush1.msra.mxu0 0.0
    %891 = vmatprep.mubr.f32.mxu0 0.0
    %892 = vmatmul.mubr.f32.gmra.mrb[0].mxu0 %v751
    %v893 = vpop.f32.mrb[0].mxu0
    %v894 = vadd.f32 0.0, %v893
    %v895 = vpop.f32.mrb[0].mxu0
    %896 = vdwg.mxu0
    %v897 = vadd.f32 %v753, %v823
    %v898 = vxor.u32 %v897, 2147483648
    %v899 = vmul.f32 %v898, 1.442695
    %v900 = vpow.pop %v899
    %v901 = vadd.f32 %v900, 1.0
    %v902 = vrcp.pop %v901
    %v903 = vmul.f32 1.0, %v902
    %v904 = vadd.f32 %v754, %v825
    %v905 = vxor.u32 %v904, 2147483648
    %v906 = vmul.f32 %v905, 1.442695
    %v907 = vpow.pop %v906
    %v908 = vadd.f32 %v907, 1.0
    %v909 = vrcp.pop %v908
    %v910 = vmul.f32 1.0, %v909
    %v911 = vadd.f32 %v894, %v577
    %v912 = vmul.f32 %v903, %v911
    %v913 = vadd.f32 %v755, %v912
    %v914 = vtanh.pop %v913
    %v915 = vsub.f32 %v751, %v914
    %v916 = vmul.f32 %v910, %v915
    %v917 = vadd.f32 %v914, %v916
    %s918 = scalar_lea.vmem [#allocation2], 72
    %v919 = vld [vmem:[%s918] sm:$0xff]
    %v920 = vld [vmem:[%s918 + $0x8] sm:$0xff]
    %v921 = vld [vmem:[%s918 + $0x10] sm:$0xff]
    %922 = vmatprep.subr.mxu0 %v366
    %923 = vmatpush1.msra.mxu0 %v365
    %924 = vmatprep.subr.mxu0 %v369
    %925 = vmatpush1.msra.mxu0 %v368
    %926 = vmatprep.subr.mxu0 %v372
    %927 = vmatpush1.msra.mxu0 %v371
    %928 = vmatprep.subr.mxu0 %v375
    %929 = vmatpush1.msra.mxu0 %v374
    %930 = vmatprep.subr.mxu0 %v378
    %931 = vmatpush1.msra.mxu0 %v377
    %932 = vmatprep.subr.mxu0 %v381
    %933 = vmatpush1.msra.mxu0 %v380
    %934 = vmatprep.subr.mxu0 %v384
    %935 = vmatpush1.msra.mxu0 %v383
    %936 = vmatprep.subr.mxu0 %v387
    %937 = vmatpush1.msra.mxu0 %v386
    %938 = vmatprep.subr.mxu0 %v390
    %939 = vmatpush1.msra.mxu0 %v389
    %940 = vmatprep.subr.mxu0 %v393
    %941 = vmatpush1.msra.mxu0 %v392
    %942 = vmatprep.subr.mxu0 %v396
    %943 = vmatpush1.msra.mxu0 %v395
    %944 = vmatprep.subr.mxu0 %v399
    %945 = vmatpush1.msra.mxu0 %v398
    %946 = vmatprep.subr.mxu0 %v402
    %947 = vmatpush1.msra.mxu0 %v401
    %948 = vmatprep.subr.mxu0 %v405
    %949 = vmatpush1.msra.mxu0 %v404
    %950 = vmatprep.subr.mxu0 %v408
    %951 = vmatpush1.msra.mxu0 %v407
    %952 = vmatprep.subr.mxu0 %v411
    %953 = vmatpush1.msra.mxu0 %v410
    %954 = vmatprep.subr.mxu0 0.0
    %955 = vmatpush1.msra.mxu0 0.0
    %956 = vmatprep.subr.mxu0 0.0
    %957 = vmatpush1.msra.mxu0 0.0
    %958 = vmatprep.subr.mxu0 0.0
    %959 = vmatpush1.msra.mxu0 0.0
    %960 = vmatprep.subr.mxu0 0.0
    %961 = vmatpush1.msra.mxu0 0.0
    %962 = vmatprep.subr.mxu0 0.0
    %963 = vmatpush1.msra.mxu0 0.0
    %964 = vmatprep.subr.mxu0 0.0
    %965 = vmatpush1.msra.mxu0 0.0
    %966 = vmatprep.subr.mxu0 0.0
    %967 = vmatpush1.msra.mxu0 0.0
    %968 = vmatprep.subr.mxu0 0.0
    %969 = vmatpush1.msra.mxu0 0.0
    %970 = vmatprep.subr.mxu0 0.0
    %971 = vmatpush1.msra.mxu0 0.0
    %972 = vmatprep.subr.mxu0 0.0
    %973 = vmatpush1.msra.mxu0 0.0
    %974 = vmatprep.subr.mxu0 0.0
    %975 = vmatpush1.msra.mxu0 0.0
    %976 = vmatprep.subr.mxu0 0.0
    %977 = vmatpush1.msra.mxu0 0.0
    %978 = vmatprep.subr.mxu0 0.0
    %979 = vmatpush1.msra.mxu0 0.0
    %980 = vmatprep.subr.mxu0 0.0
    %981 = vmatpush1.msra.mxu0 0.0
    %982 = vmatprep.subr.mxu0 0.0
    %983 = vmatpush1.msra.mxu0 0.0
    %984 = vmatprep.subr.mxu0 0.0
    %985 = vmatpush1.msra.mxu0 0.0
    %986 = vmatprep.mubr.f32.mxu0 0.0
    %987 = vmatmul.mubr.f32.gmra.mrb[0].mxu0 %v917
    %v988 = vpop.f32.mrb[0].mxu0
    %v989 = vadd.f32 0.0, %v988
    %v990 = vpop.f32.mrb[0].mxu0
    %v991 = vadd.f32 0.0, %v990
    %992 = vdwg.mxu0
    %993 = vmatprep.subr.mxu0 0.0
    %994 = vmatpush1.msra.mxu0 %v367
    %995 = vmatprep.subr.mxu0 0.0
    %996 = vmatpush1.msra.mxu0 %v370
    %997 = vmatprep.subr.mxu0 0.0
    %998 = vmatpush1.msra.mxu0 %v373
    %999 = vmatprep.subr.mxu0 0.0
    %1000 = vmatpush1.msra.mxu0 %v376
    %1001 = vmatprep.subr.mxu0 0.0
    %1002 = vmatpush1.msra.mxu0 %v379
    %1003 = vmatprep.subr.mxu0 0.0
    %1004 = vmatpush1.msra.mxu0 %v382
    %1005 = vmatprep.subr.mxu0 0.0
    %1006 = vmatpush1.msra.mxu0 %v385
    %1007 = vmatprep.subr.mxu0 0.0
    %1008 = vmatpush1.msra.mxu0 %v388
    %1009 = vmatprep.subr.mxu0 0.0
    %1010 = vmatpush1.msra.mxu0 %v391
    %1011 = vmatprep.subr.mxu0 0.0
    %1012 = vmatpush1.msra.mxu0 %v394
    %1013 = vmatprep.subr.mxu0 0.0
    %1014 = vmatpush1.msra.mxu0 %v397
    %1015 = vmatprep.subr.mxu0 0.0
    %1016 = vmatpush1.msra.mxu0 %v400
    %1017 = vmatprep.subr.mxu0 0.0
    %1018 = vmatpush1.msra.mxu0 %v403
    %1019 = vmatprep.subr.mxu0 0.0
    %1020 = vmatpush1.msra.mxu0 %v406
    %1021 = vmatprep.subr.mxu0 0.0
    %1022 = vmatpush1.msra.mxu0 %v409
    %1023 = vmatprep.subr.mxu0 0.0
    %1024 = vmatpush1.msra.mxu0 %v412
    %1025 = vmatprep.subr.mxu0 0.0
    %1026 = vmatpush1.msra.mxu0 0.0
    %1027 = vmatprep.subr.mxu0 0.0
    %1028 = vmatpush1.msra.mxu0 0.0
    %1029 = vmatprep.subr.mxu0 0.0
    %1030 = vmatpush1.msra.mxu0 0.0
    %1031 = vmatprep.subr.mxu0 0.0
    %1032 = vmatpush1.msra.mxu0 0.0
    %1033 = vmatprep.subr.mxu0 0.0
    %1034 = vmatpush1.msra.mxu0 0.0
    %1035 = vmatprep.subr.mxu0 0.0
    %1036 = vmatpush1.msra.mxu0 0.0
    %1037 = vmatprep.subr.mxu0 0.0
    %1038 = vmatpush1.msra.mxu0 0.0
    %1039 = vmatprep.subr.mxu0 0.0
    %1040 = vmatpush1.msra.mxu0 0.0
    %1041 = vmatprep.subr.mxu0 0.0
    %1042 = vmatpush1.msra.mxu0 0.0
    %1043 = vmatprep.subr.mxu0 0.0
    %1044 = vmatpush1.msra.mxu0 0.0
    %1045 = vmatprep.subr.mxu0 0.0
    %1046 = vmatpush1.msra.mxu0 0.0
    %1047 = vmatprep.subr.mxu0 0.0
    %1048 = vmatpush1.msra.mxu0 0.0
    %1049 = vmatprep.subr.mxu0 0.0
    %1050 = vmatpush1.msra.mxu0 0.0
    %1051 = vmatprep.subr.mxu0 0.0
    %1052 = vmatpush1.msra.mxu0 0.0
    %1053 = vmatprep.subr.mxu0 0.0
    %1054 = vmatpush1.msra.mxu0 0.0
    %1055 = vmatprep.subr.mxu0 0.0
    %1056 = vmatpush1.msra.mxu0 0.0
    %1057 = vmatprep.mubr.f32.mxu0 0.0
    %1058 = vmatmul.mubr.f32.gmra.mrb[0].mxu0 %v917
    %v1059 = vpop.f32.mrb[0].mxu0
    %v1060 = vadd.f32 0.0, %v1059
    %v1061 = vpop.f32.mrb[0].mxu0
    %1062 = vdwg.mxu0
    %v1063 = vadd.f32 %v919, %v989
    %v1064 = vxor.u32 %v1063, 2147483648
    %v1065 = vmul.f32 %v1064, 1.442695
    %v1066 = vpow.pop %v1065
    %v1067 = vadd.f32 %v1066, 1.0
    %v1068 = vrcp.pop %v1067
    %v1069 = vmul.f32 1.0, %v1068
    %v1070 = vadd.f32 %v920, %v991
    %v1071 = vxor.u32 %v1070, 2147483648
    %v1072 = vmul.f32 %v1071, 1.442695
    %v1073 = vpow.pop %v1072
    %v1074 = vadd.f32 %v1073, 1.0
    %v1075 = vrcp.pop %v1074
    %v1076 = vmul.f32 1.0, %v1075
    %v1077 = vadd.f32 %v1060, %v577
    %v1078 = vmul.f32 %v1069, %v1077
    %v1079 = vadd.f32 %v921, %v1078
    %v1080 = vtanh.pop %v1079
    %v1081 = vsub.f32 %v917, %v1080
    %v1082 = vmul.f32 %v1076, %v1081
    %v1083 = vadd.f32 %v1080, %v1082
    %s1084 = scalar_lea.vmem [#allocation2], 96
    %v1085 = vld [vmem:[%s1084] sm:$0xff]
    %v1086 = vld [vmem:[%s1084 + $0x8] sm:$0xff]
    %v1087 = vld [vmem:[%s1084 + $0x10] sm:$0xff]
    %1088 = vmatprep.subr.mxu0 %v366
    %1089 = vmatpush1.msra.mxu0 %v365
    %1090 = vmatprep.subr.mxu0 %v369
    %1091 = vmatpush1.msra.mxu0 %v368
    %1092 = vmatprep.subr.mxu0 %v372
    %1093 = vmatpush1.msra.mxu0 %v371
    %1094 = vmatprep.subr.mxu0 %v375
    %1095 = vmatpush1.msra.mxu0 %v374
    %1096 = vmatprep.subr.mxu0 %v378
    %1097 = vmatpush1.msra.mxu0 %v377
    %1098 = vmatprep.subr.mxu0 %v381
    %1099 = vmatpush1.msra.mxu0 %v380
    %1100 = vmatprep.subr.mxu0 %v384
    %1101 = vmatpush1.msra.mxu0 %v383
    %1102 = vmatprep.subr.mxu0 %v387
    %1103 = vmatpush1.msra.mxu0 %v386
    %1104 = vmatprep.subr.mxu0 %v390
    %1105 = vmatpush1.msra.mxu0 %v389
    %1106 = vmatprep.subr.mxu0 %v393
    %1107 = vmatpush1.msra.mxu0 %v392
    %1108 = vmatprep.subr.mxu0 %v396
    %1109 = vmatpush1.msra.mxu0 %v395
    %1110 = vmatprep.subr.mxu0 %v399
    %1111 = vmatpush1.msra.mxu0 %v398
    %1112 = vmatprep.subr.mxu0 %v402
    %1113 = vmatpush1.msra.mxu0 %v401
    %1114 = vmatprep.subr.mxu0 %v405
    %1115 = vmatpush1.msra.mxu0 %v404
    %1116 = vmatprep.subr.mxu0 %v408
    %1117 = vmatpush1.msra.mxu0 %v407
    %1118 = vmatprep.subr.mxu0 %v411
    %1119 = vmatpush1.msra.mxu0 %v410
    %1120 = vmatprep.subr.mxu0 0.0
    %1121 = vmatpush1.msra.mxu0 0.0
    %1122 = vmatprep.subr.mxu0 0.0
    %1123 = vmatpush1.msra.mxu0 0.0
    %1124 = vmatprep.subr.mxu0 0.0
    %1125 = vmatpush1.msra.mxu0 0.0
    %1126 = vmatprep.subr.mxu0 0.0
    %1127 = vmatpush1.msra.mxu0 0.0
    %1128 = vmatprep.subr.mxu0 0.0
    %1129 = vmatpush1.msra.mxu0 0.0
    %1130 = vmatprep.subr.mxu0 0.0
    %1131 = vmatpush1.msra.mxu0 0.0
    %1132 = vmatprep.subr.mxu0 0.0
    %1133 = vmatpush1.msra.mxu0 0.0
    %1134 = vmatprep.subr.mxu0 0.0
    %1135 = vmatpush1.msra.mxu0 0.0
    %1136 = vmatprep.subr.mxu0 0.0
    %1137 = vmatpush1.msra.mxu0 0.0
    %1138 = vmatprep.subr.mxu0 0.0
    %1139 = vmatpush1.msra.mxu0 0.0
    %1140 = vmatprep.subr.mxu0 0.0
    %1141 = vmatpush1.msra.mxu0 0.0
    %1142 = vmatprep.subr.mxu0 0.0
    %1143 = vmatpush1.msra.mxu0 0.0
    %1144 = vmatprep.subr.mxu0 0.0
    %1145 = vmatpush1.msra.mxu0 0.0
    %1146 = vmatprep.subr.mxu0 0.0
    %1147 = vmatpush1.msra.mxu0 0.0
    %1148 = vmatprep.subr.mxu0 0.0
    %1149 = vmatpush1.msra.mxu0 0.0
    %1150 = vmatprep.subr.mxu0 0.0
    %1151 = vmatpush1.msra.mxu0 0.0
    %1152 = vmatprep.mubr.f32.mxu0 0.0
    %1153 = vmatmul.mubr.f32.gmra.mrb[0].mxu0 %v1083
    %v1154 = vpop.f32.mrb[0].mxu0
    %v1155 = vadd.f32 0.0, %v1154
    %v1156 = vpop.f32.mrb[0].mxu0
    %v1157 = vadd.f32 0.0, %v1156
    %1158 = vdwg.mxu0
    %1159 = vmatprep.subr.mxu0 0.0
    %1160 = vmatpush1.msra.mxu0 %v367
    %1161 = vmatprep.subr.mxu0 0.0
    %1162 = vmatpush1.msra.mxu0 %v370
    %1163 = vmatprep.subr.mxu0 0.0
    %1164 = vmatpush1.msra.mxu0 %v373
    %1165 = vmatprep.subr.mxu0 0.0
    %1166 = vmatpush1.msra.mxu0 %v376
    %1167 = vmatprep.subr.mxu0 0.0
    %1168 = vmatpush1.msra.mxu0 %v379
    %1169 = vmatprep.subr.mxu0 0.0
    %1170 = vmatpush1.msra.mxu0 %v382
    %1171 = vmatprep.subr.mxu0 0.0
    %1172 = vmatpush1.msra.mxu0 %v385
    %1173 = vmatprep.subr.mxu0 0.0
    %1174 = vmatpush1.msra.mxu0 %v388
    %1175 = vmatprep.subr.mxu0 0.0
    %1176 = vmatpush1.msra.mxu0 %v391
    %1177 = vmatprep.subr.mxu0 0.0
    %1178 = vmatpush1.msra.mxu0 %v394
    %1179 = vmatprep.subr.mxu0 0.0
    %1180 = vmatpush1.msra.mxu0 %v397
    %1181 = vmatprep.subr.mxu0 0.0
    %1182 = vmatpush1.msra.mxu0 %v400
    %1183 = vmatprep.subr.mxu0 0.0
    %1184 = vmatpush1.msra.mxu0 %v403
    %1185 = vmatprep.subr.mxu0 0.0
    %1186 = vmatpush1.msra.mxu0 %v406
    %1187 = vmatprep.subr.mxu0 0.0
    %1188 = vmatpush1.msra.mxu0 %v409
    %1189 = vmatprep.subr.mxu0 0.0
    %1190 = vmatpush1.msra.mxu0 %v412
    %1191 = vmatprep.subr.mxu0 0.0
    %1192 = vmatpush1.msra.mxu0 0.0
    %1193 = vmatprep.subr.mxu0 0.0
    %1194 = vmatpush1.msra.mxu0 0.0
    %1195 = vmatprep.subr.mxu0 0.0
    %1196 = vmatpush1.msra.mxu0 0.0
    %1197 = vmatprep.subr.mxu0 0.0
    %1198 = vmatpush1.msra.mxu0 0.0
    %1199 = vmatprep.subr.mxu0 0.0
    %1200 = vmatpush1.msra.mxu0 0.0
    %1201 = vmatprep.subr.mxu0 0.0
    %1202 = vmatpush1.msra.mxu0 0.0
    %1203 = vmatprep.subr.mxu0 0.0
    %1204 = vmatpush1.msra.mxu0 0.0
    %1205 = vmatprep.subr.mxu0 0.0
    %1206 = vmatpush1.msra.mxu0 0.0
    %1207 = vmatprep.subr.mxu0 0.0
    %1208 = vmatpush1.msra.mxu0 0.0
    %1209 = vmatprep.subr.mxu0 0.0
    %1210 = vmatpush1.msra.mxu0 0.0
    %1211 = vmatprep.subr.mxu0 0.0
    %1212 = vmatpush1.msra.mxu0 0.0
    %1213 = vmatprep.subr.mxu0 0.0
    %1214 = vmatpush1.msra.mxu0 0.0
    %1215 = vmatprep.subr.mxu0 0.0
    %1216 = vmatpush1.msra.mxu0 0.0
    %1217 = vmatprep.subr.mxu0 0.0
    %1218 = vmatpush1.msra.mxu0 0.0
    %1219 = vmatprep.subr.mxu0 0.0
    %1220 = vmatpush1.msra.mxu0 0.0
    %1221 = vmatprep.subr.mxu0 0.0
    %1222 = vmatpush1.msra.mxu0 0.0
    %1223 = vmatprep.mubr.f32.mxu0 0.0
    %1224 = vmatmul.mubr.f32.gmra.mrb[0].mxu0 %v1083
    %v1225 = vpop.f32.mrb[0].mxu0
    %v1226 = vadd.f32 0.0, %v1225
    %v1227 = vpop.f32.mrb[0].mxu0
    %1228 = vdwg.mxu0
    %v1229 = vadd.f32 %v1085, %v1155
    %v1230 = vxor.u32 %v1229, 2147483648
    %v1231 = vmul.f32 %v1230, 1.442695
    %v1232 = vpow.pop %v1231
    %v1233 = vadd.f32 %v1232, 1.0
    %v1234 = vrcp.pop %v1233
    %v1235 = vmul.f32 1.0, %v1234
    %v1236 = vadd.f32 %v1086, %v1157
    %v1237 = vxor.u32 %v1236, 2147483648
    %v1238 = vmul.f32 %v1237, 1.442695
    %v1239 = vpow.pop %v1238
    %v1240 = vadd.f32 %v1239, 1.0
    %v1241 = vrcp.pop %v1240
    %v1242 = vmul.f32 1.0, %v1241
    %v1243 = vadd.f32 %v1226, %v577
    %v1244 = vmul.f32 %v1235, %v1243
    %v1245 = vadd.f32 %v1087, %v1244
    %v1246 = vtanh.pop %v1245
    %v1247 = vsub.f32 %v1083, %v1246
    %v1248 = vmul.f32 %v1242, %v1247
    %v1249 = vadd.f32 %v1246, %v1248
    %s1250 = scalar_lea.vmem [#allocation2], 120
    %v1251 = vld [vmem:[%s1250] sm:$0xff]
    %v1252 = vld [vmem:[%s1250 + $0x8] sm:$0xff]
    %v1253 = vld [vmem:[%s1250 + $0x10] sm:$0xff]
    %1254 = vmatprep.subr.mxu0 %v366
    %1255 = vmatpush1.msra.mxu0 %v365
    %1256 = vmatprep.subr.mxu0 %v369
    %1257 = vmatpush1.msra.mxu0 %v368
    %1258 = vmatprep.subr.mxu0 %v372
    %1259 = vmatpush1.msra.mxu0 %v371
    %1260 = vmatprep.subr.mxu0 %v375
    %1261 = vmatpush1.msra.mxu0 %v374
    %1262 = vmatprep.subr.mxu0 %v378
    %1263 = vmatpush1.msra.mxu0 %v377
    %1264 = vmatprep.subr.mxu0 %v381
    %1265 = vmatpush1.msra.mxu0 %v380
    %1266 = vmatprep.subr.mxu0 %v384
    %1267 = vmatpush1.msra.mxu0 %v383
    %1268 = vmatprep.subr.mxu0 %v387
    %1269 = vmatpush1.msra.mxu0 %v386
    %1270 = vmatprep.subr.mxu0 %v390
    %1271 = vmatpush1.msra.mxu0 %v389
    %1272 = vmatprep.subr.mxu0 %v393
    %1273 = vmatpush1.msra.mxu0 %v392
    %1274 = vmatprep.subr.mxu0 %v396
    %1275 = vmatpush1.msra.mxu0 %v395
    %1276 = vmatprep.subr.mxu0 %v399
    %1277 = vmatpush1.msra.mxu0 %v398
    %1278 = vmatprep.subr.mxu0 %v402
    %1279 = vmatpush1.msra.mxu0 %v401
    %1280 = vmatprep.subr.mxu0 %v405
    %1281 = vmatpush1.msra.mxu0 %v404
    %1282 = vmatprep.subr.mxu0 %v408
    %1283 = vmatpush1.msra.mxu0 %v407
    %1284 = vmatprep.subr.mxu0 %v411
    %1285 = vmatpush1.msra.mxu0 %v410
    %1286 = vmatprep.subr.mxu0 0.0
    %1287 = vmatpush1.msra.mxu0 0.0
    %1288 = vmatprep.subr.mxu0 0.0
    %1289 = vmatpush1.msra.mxu0 0.0
    %1290 = vmatprep.subr.mxu0 0.0
    %1291 = vmatpush1.msra.mxu0 0.0
    %1292 = vmatprep.subr.mxu0 0.0
    %1293 = vmatpush1.msra.mxu0 0.0
    %1294 = vmatprep.subr.mxu0 0.0
    %1295 = vmatpush1.msra.mxu0 0.0
    %1296 = vmatprep.subr.mxu0 0.0
    %1297 = vmatpush1.msra.mxu0 0.0
    %1298 = vmatprep.subr.mxu0 0.0
    %1299 = vmatpush1.msra.mxu0 0.0
    %1300 = vmatprep.subr.mxu0 0.0
    %1301 = vmatpush1.msra.mxu0 0.0
    %1302 = vmatprep.subr.mxu0 0.0
    %1303 = vmatpush1.msra.mxu0 0.0
    %1304 = vmatprep.subr.mxu0 0.0
    %1305 = vmatpush1.msra.mxu0 0.0
    %1306 = vmatprep.subr.mxu0 0.0
    %1307 = vmatpush1.msra.mxu0 0.0
    %1308 = vmatprep.subr.mxu0 0.0
    %1309 = vmatpush1.msra.mxu0 0.0
    %1310 = vmatprep.subr.mxu0 0.0
    %1311 = vmatpush1.msra.mxu0 0.0
    %1312 = vmatprep.subr.mxu0 0.0
    %1313 = vmatpush1.msra.mxu0 0.0
    %1314 = vmatprep.subr.mxu0 0.0
    %1315 = vmatpush1.msra.mxu0 0.0
    %1316 = vmatprep.subr.mxu0 0.0
    %1317 = vmatpush1.msra.mxu0 0.0
    %1318 = vmatprep.mubr.f32.mxu0 0.0
    %1319 = vmatmul.mubr.f32.gmra.mrb[0].mxu0 %v1249
    %v1320 = vpop.f32.mrb[0].mxu0
    %v1321 = vadd.f32 0.0, %v1320
    %v1322 = vpop.f32.mrb[0].mxu0
    %v1323 = vadd.f32 0.0, %v1322
    %1324 = vdwg.mxu0
    %1325 = vmatprep.subr.mxu0 0.0
    %1326 = vmatpush1.msra.mxu0 %v367
    %1327 = vmatprep.subr.mxu0 0.0
    %1328 = vmatpush1.msra.mxu0 %v370
    %1329 = vmatprep.subr.mxu0 0.0
    %1330 = vmatpush1.msra.mxu0 %v373
    %1331 = vmatprep.subr.mxu0 0.0
    %1332 = vmatpush1.msra.mxu0 %v376
    %1333 = vmatprep.subr.mxu0 0.0
    %1334 = vmatpush1.msra.mxu0 %v379
    %1335 = vmatprep.subr.mxu0 0.0
    %1336 = vmatpush1.msra.mxu0 %v382
    %1337 = vmatprep.subr.mxu0 0.0
    %1338 = vmatpush1.msra.mxu0 %v385
    %1339 = vmatprep.subr.mxu0 0.0
    %1340 = vmatpush1.msra.mxu0 %v388
    %1341 = vmatprep.subr.mxu0 0.0
    %1342 = vmatpush1.msra.mxu0 %v391
    %1343 = vmatprep.subr.mxu0 0.0
    %1344 = vmatpush1.msra.mxu0 %v394
    %1345 = vmatprep.subr.mxu0 0.0
    %1346 = vmatpush1.msra.mxu0 %v397
    %1347 = vmatprep.subr.mxu0 0.0
    %1348 = vmatpush1.msra.mxu0 %v400
    %1349 = vmatprep.subr.mxu0 0.0
    %1350 = vmatpush1.msra.mxu0 %v403
    %1351 = vmatprep.subr.mxu0 0.0
    %1352 = vmatpush1.msra.mxu0 %v406
    %1353 = vmatprep.subr.mxu0 0.0
    %1354 = vmatpush1.msra.mxu0 %v409
    %1355 = vmatprep.subr.mxu0 0.0
    %1356 = vmatpush1.msra.mxu0 %v412
    %1357 = vmatprep.subr.mxu0 0.0
    %1358 = vmatpush1.msra.mxu0 0.0
    %1359 = vmatprep.subr.mxu0 0.0
    %1360 = vmatpush1.msra.mxu0 0.0
    %1361 = vmatprep.subr.mxu0 0.0
    %1362 = vmatpush1.msra.mxu0 0.0
    %1363 = vmatprep.subr.mxu0 0.0
    %1364 = vmatpush1.msra.mxu0 0.0
    %1365 = vmatprep.subr.mxu0 0.0
    %1366 = vmatpush1.msra.mxu0 0.0
    %1367 = vmatprep.subr.mxu0 0.0
    %1368 = vmatpush1.msra.mxu0 0.0
    %1369 = vmatprep.subr.mxu0 0.0
    %1370 = vmatpush1.msra.mxu0 0.0
    %1371 = vmatprep.subr.mxu0 0.0
    %1372 = vmatpush1.msra.mxu0 0.0
    %1373 = vmatprep.subr.mxu0 0.0
    %1374 = vmatpush1.msra.mxu0 0.0
    %1375 = vmatprep.subr.mxu0 0.0
    %1376 = vmatpush1.msra.mxu0 0.0
    %1377 = vmatprep.subr.mxu0 0.0
    %1378 = vmatpush1.msra.mxu0 0.0
    %1379 = vmatprep.subr.mxu0 0.0
    %1380 = vmatpush1.msra.mxu0 0.0
    %1381 = vmatprep.subr.mxu0 0.0
    %1382 = vmatpush1.msra.mxu0 0.0
    %1383 = vmatprep.subr.mxu0 0.0
    %1384 = vmatpush1.msra.mxu0 0.0
    %1385 = vmatprep.subr.mxu0 0.0
    %1386 = vmatpush1.msra.mxu0 0.0
    %1387 = vmatprep.subr.mxu0 0.0
    %1388 = vmatpush1.msra.mxu0 0.0
    %1389 = vmatprep.mubr.f32.mxu0 0.0
    %1390 = vmatmul.mubr.f32.gmra.mrb[0].mxu0 %v1249
    %v1391 = vpop.f32.mrb[0].mxu0
    %v1392 = vadd.f32 0.0, %v1391
    %v1393 = vpop.f32.mrb[0].mxu0
    %1394 = vdwg.mxu0
    %v1395 = vadd.f32 %v1251, %v1321
    %v1396 = vxor.u32 %v1395, 2147483648
    %v1397 = vmul.f32 %v1396, 1.442695
    %v1398 = vpow.pop %v1397
    %v1399 = vadd.f32 %v1398, 1.0
    %v1400 = vrcp.pop %v1399
    %v1401 = vmul.f32 1.0, %v1400
    %v1402 = vadd.f32 %v1252, %v1323
    %v1403 = vxor.u32 %v1402, 2147483648
    %v1404 = vmul.f32 %v1403, 1.442695
    %v1405 = vpow.pop %v1404
    %v1406 = vadd.f32 %v1405, 1.0
    %v1407 = vrcp.pop %v1406
    %v1408 = vmul.f32 1.0, %v1407
    %v1409 = vadd.f32 %v1392, %v577
    %v1410 = vmul.f32 %v1401, %v1409
    %v1411 = vadd.f32 %v1253, %v1410
    %v1412 = vtanh.pop %v1411
    %v1413 = vsub.f32 %v1249, %v1412
    %v1414 = vmul.f32 %v1408, %v1413
    %v1415 = vadd.f32 %v1412, %v1414
    %s1416 = scalar_lea.vmem [#allocation2], 144
    %v1417 = vld [vmem:[%s1416] sm:$0xff]
    %v1418 = vld [vmem:[%s1416 + $0x8] sm:$0xff]
    %v1419 = vld [vmem:[%s1416 + $0x10] sm:$0xff]
    %1420 = vmatprep.subr.mxu0 %v366
    %1421 = vmatpush1.msra.mxu0 %v365
    %1422 = vmatprep.subr.mxu0 %v369
    %1423 = vmatpush1.msra.mxu0 %v368
    %1424 = vmatprep.subr.mxu0 %v372
    %1425 = vmatpush1.msra.mxu0 %v371
    %1426 = vmatprep.subr.mxu0 %v375
    %1427 = vmatpush1.msra.mxu0 %v374
    %1428 = vmatprep.subr.mxu0 %v378
    %1429 = vmatpush1.msra.mxu0 %v377
    %1430 = vmatprep.subr.mxu0 %v381
    %1431 = vmatpush1.msra.mxu0 %v380
    %1432 = vmatprep.subr.mxu0 %v384
    %1433 = vmatpush1.msra.mxu0 %v383
    %1434 = vmatprep.subr.mxu0 %v387
    %1435 = vmatpush1.msra.mxu0 %v386
    %1436 = vmatprep.subr.mxu0 %v390
    %1437 = vmatpush1.msra.mxu0 %v389
    %1438 = vmatprep.subr.mxu0 %v393
    %1439 = vmatpush1.msra.mxu0 %v392
    %1440 = vmatprep.subr.mxu0 %v396
    %1441 = vmatpush1.msra.mxu0 %v395
    %1442 = vmatprep.subr.mxu0 %v399
    %1443 = vmatpush1.msra.mxu0 %v398
    %1444 = vmatprep.subr.mxu0 %v402
    %1445 = vmatpush1.msra.mxu0 %v401
    %1446 = vmatprep.subr.mxu0 %v405
    %1447 = vmatpush1.msra.mxu0 %v404
    %1448 = vmatprep.subr.mxu0 %v408
    %1449 = vmatpush1.msra.mxu0 %v407
    %1450 = vmatprep.subr.mxu0 %v411
    %1451 = vmatpush1.msra.mxu0 %v410
    %1452 = vmatprep.subr.mxu0 0.0
    %1453 = vmatpush1.msra.mxu0 0.0
    %1454 = vmatprep.subr.mxu0 0.0
    %1455 = vmatpush1.msra.mxu0 0.0
    %1456 = vmatprep.subr.mxu0 0.0
    %1457 = vmatpush1.msra.mxu0 0.0
    %1458 = vmatprep.subr.mxu0 0.0
    %1459 = vmatpush1.msra.mxu0 0.0
    %1460 = vmatprep.subr.mxu0 0.0
    %1461 = vmatpush1.msra.mxu0 0.0
    %1462 = vmatprep.subr.mxu0 0.0
    %1463 = vmatpush1.msra.mxu0 0.0
    %1464 = vmatprep.subr.mxu0 0.0
    %1465 = vmatpush1.msra.mxu0 0.0
    %1466 = vmatprep.subr.mxu0 0.0
    %1467 = vmatpush1.msra.mxu0 0.0
    %1468 = vmatprep.subr.mxu0 0.0
    %1469 = vmatpush1.msra.mxu0 0.0
    %1470 = vmatprep.subr.mxu0 0.0
    %1471 = vmatpush1.msra.mxu0 0.0
    %1472 = vmatprep.subr.mxu0 0.0
    %1473 = vmatpush1.msra.mxu0 0.0
    %1474 = vmatprep.subr.mxu0 0.0
    %1475 = vmatpush1.msra.mxu0 0.0
    %1476 = vmatprep.subr.mxu0 0.0
    %1477 = vmatpush1.msra.mxu0 0.0
    %1478 = vmatprep.subr.mxu0 0.0
    %1479 = vmatpush1.msra.mxu0 0.0
    %1480 = vmatprep.subr.mxu0 0.0
    %1481 = vmatpush1.msra.mxu0 0.0
    %1482 = vmatprep.subr.mxu0 0.0
    %1483 = vmatpush1.msra.mxu0 0.0
    %1484 = vmatprep.mubr.f32.mxu0 0.0
    %1485 = vmatmul.mubr.f32.gmra.mrb[0].mxu0 %v1415
    %v1486 = vpop.f32.mrb[0].mxu0
    %v1487 = vadd.f32 0.0, %v1486
    %v1488 = vpop.f32.mrb[0].mxu0
    %v1489 = vadd.f32 0.0, %v1488
    %1490 = vdwg.mxu0
    %1491 = vmatprep.subr.mxu0 0.0
    %1492 = vmatpush1.msra.mxu0 %v367
    %1493 = vmatprep.subr.mxu0 0.0
    %1494 = vmatpush1.msra.mxu0 %v370
    %1495 = vmatprep.subr.mxu0 0.0
    %1496 = vmatpush1.msra.mxu0 %v373
    %1497 = vmatprep.subr.mxu0 0.0
    %1498 = vmatpush1.msra.mxu0 %v376
    %1499 = vmatprep.subr.mxu0 0.0
    %1500 = vmatpush1.msra.mxu0 %v379
    %1501 = vmatprep.subr.mxu0 0.0
    %1502 = vmatpush1.msra.mxu0 %v382
    %1503 = vmatprep.subr.mxu0 0.0
    %1504 = vmatpush1.msra.mxu0 %v385
    %1505 = vmatprep.subr.mxu0 0.0
    %1506 = vmatpush1.msra.mxu0 %v388
    %1507 = vmatprep.subr.mxu0 0.0
    %1508 = vmatpush1.msra.mxu0 %v391
    %1509 = vmatprep.subr.mxu0 0.0
    %1510 = vmatpush1.msra.mxu0 %v394
    %1511 = vmatprep.subr.mxu0 0.0
    %1512 = vmatpush1.msra.mxu0 %v397
    %1513 = vmatprep.subr.mxu0 0.0
    %1514 = vmatpush1.msra.mxu0 %v400
    %1515 = vmatprep.subr.mxu0 0.0
    %1516 = vmatpush1.msra.mxu0 %v403
    %1517 = vmatprep.subr.mxu0 0.0
    %1518 = vmatpush1.msra.mxu0 %v406
    %1519 = vmatprep.subr.mxu0 0.0
    %1520 = vmatpush1.msra.mxu0 %v409
    %1521 = vmatprep.subr.mxu0 0.0
    %1522 = vmatpush1.msra.mxu0 %v412
    %1523 = vmatprep.subr.mxu0 0.0
    %1524 = vmatpush1.msra.mxu0 0.0
    %1525 = vmatprep.subr.mxu0 0.0
    %1526 = vmatpush1.msra.mxu0 0.0
    %1527 = vmatprep.subr.mxu0 0.0
    %1528 = vmatpush1.msra.mxu0 0.0
    %1529 = vmatprep.subr.mxu0 0.0
    %1530 = vmatpush1.msra.mxu0 0.0
    %1531 = vmatprep.subr.mxu0 0.0
    %1532 = vmatpush1.msra.mxu0 0.0
    %1533 = vmatprep.subr.mxu0 0.0
    %1534 = vmatpush1.msra.mxu0 0.0
    %1535 = vmatprep.subr.mxu0 0.0
    %1536 = vmatpush1.msra.mxu0 0.0
    %1537 = vmatprep.subr.mxu0 0.0
    %1538 = vmatpush1.msra.mxu0 0.0
    %1539 = vmatprep.subr.mxu0 0.0
    %1540 = vmatpush1.msra.mxu0 0.0
    %1541 = vmatprep.subr.mxu0 0.0
    %1542 = vmatpush1.msra.mxu0 0.0
    %1543 = vmatprep.subr.mxu0 0.0
    %1544 = vmatpush1.msra.mxu0 0.0
    %1545 = vmatprep.subr.mxu0 0.0
    %1546 = vmatpush1.msra.mxu0 0.0
    %1547 = vmatprep.subr.mxu0 0.0
    %1548 = vmatpush1.msra.mxu0 0.0
    %1549 = vmatprep.subr.mxu0 0.0
    %1550 = vmatpush1.msra.mxu0 0.0
    %1551 = vmatprep.subr.mxu0 0.0
    %1552 = vmatpush1.msra.mxu0 0.0
    %1553 = vmatprep.subr.mxu0 0.0
    %1554 = vmatpush1.msra.mxu0 0.0
    %1555 = vmatprep.mubr.f32.mxu0 0.0
    %1556 = vmatmul.mubr.f32.gmra.mrb[0].mxu0 %v1415
    %v1557 = vpop.f32.mrb[0].mxu0
    %v1558 = vadd.f32 0.0, %v1557
    %v1559 = vpop.f32.mrb[0].mxu0
    %1560 = vdwg.mxu0
    %v1561 = vadd.f32 %v1417, %v1487
    %v1562 = vxor.u32 %v1561, 2147483648
    %v1563 = vmul.f32 %v1562, 1.442695
    %v1564 = vpow.pop %v1563
    %v1565 = vadd.f32 %v1564, 1.0
    %v1566 = vrcp.pop %v1565
    %v1567 = vmul.f32 1.0, %v1566
    %v1568 = vadd.f32 %v1418, %v1489
    %v1569 = vxor.u32 %v1568, 2147483648
    %v1570 = vmul.f32 %v1569, 1.442695
    %v1571 = vpow.pop %v1570
    %v1572 = vadd.f32 %v1571, 1.0
    %v1573 = vrcp.pop %v1572
    %v1574 = vmul.f32 1.0, %v1573
    %v1575 = vadd.f32 %v1558, %v577
    %v1576 = vmul.f32 %v1567, %v1575
    %v1577 = vadd.f32 %v1419, %v1576
    %v1578 = vtanh.pop %v1577
    %v1579 = vsub.f32 %v1415, %v1578
    %v1580 = vmul.f32 %v1574, %v1579
    %v1581 = vadd.f32 %v1578, %v1580
    %s1582 = scalar_lea.vmem [#allocation2], 168
    %v1583 = vld [vmem:[%s1582] sm:$0xff]
    %v1584 = vld [vmem:[%s1582 + $0x8] sm:$0xff]
    %v1585 = vld [vmem:[%s1582 + $0x10] sm:$0xff]
    %1586 = vmatprep.subr.mxu0 %v366
    %1587 = vmatpush1.msra.mxu0 %v365
    %1588 = vmatprep.subr.mxu0 %v369
    %1589 = vmatpush1.msra.mxu0 %v368
    %1590 = vmatprep.subr.mxu0 %v372
    %1591 = vmatpush1.msra.mxu0 %v371
    %1592 = vmatprep.subr.mxu0 %v375
    %1593 = vmatpush1.msra.mxu0 %v374
    %1594 = vmatprep.subr.mxu0 %v378
    %1595 = vmatpush1.msra.mxu0 %v377
    %1596 = vmatprep.subr.mxu0 %v381
    %1597 = vmatpush1.msra.mxu0 %v380
    %1598 = vmatprep.subr.mxu0 %v384
    %1599 = vmatpush1.msra.mxu0 %v383
    %1600 = vmatprep.subr.mxu0 %v387
    %1601 = vmatpush1.msra.mxu0 %v386
    %1602 = vmatprep.subr.mxu0 %v390
    %1603 = vmatpush1.msra.mxu0 %v389
    %1604 = vmatprep.subr.mxu0 %v393
    %1605 = vmatpush1.msra.mxu0 %v392
    %1606 = vmatprep.subr.mxu0 %v396
    %1607 = vmatpush1.msra.mxu0 %v395
    %1608 = vmatprep.subr.mxu0 %v399
    %1609 = vmatpush1.msra.mxu0 %v398
    %1610 = vmatprep.subr.mxu0 %v402
    %1611 = vmatpush1.msra.mxu0 %v401
    %1612 = vmatprep.subr.mxu0 %v405
    %1613 = vmatpush1.msra.mxu0 %v404
    %1614 = vmatprep.subr.mxu0 %v408
    %1615 = vmatpush1.msra.mxu0 %v407
    %1616 = vmatprep.subr.mxu0 %v411
    %1617 = vmatpush1.msra.mxu0 %v410
    %1618 = vmatprep.subr.mxu0 0.0
    %1619 = vmatpush1.msra.mxu0 0.0
    %1620 = vmatprep.subr.mxu0 0.0
    %1621 = vmatpush1.msra.mxu0 0.0
    %1622 = vmatprep.subr.mxu0 0.0
    %1623 = vmatpush1.msra.mxu0 0.0
    %1624 = vmatprep.subr.mxu0 0.0
    %1625 = vmatpush1.msra.mxu0 0.0
    %1626 = vmatprep.subr.mxu0 0.0
    %1627 = vmatpush1.msra.mxu0 0.0
    %1628 = vmatprep.subr.mxu0 0.0
    %1629 = vmatpush1.msra.mxu0 0.0
    %1630 = vmatprep.subr.mxu0 0.0
    %1631 = vmatpush1.msra.mxu0 0.0
    %1632 = vmatprep.subr.mxu0 0.0
    %1633 = vmatpush1.msra.mxu0 0.0
    %1634 = vmatprep.subr.mxu0 0.0
    %1635 = vmatpush1.msra.mxu0 0.0
    %1636 = vmatprep.subr.mxu0 0.0
    %1637 = vmatpush1.msra.mxu0 0.0
    %1638 = vmatprep.subr.mxu0 0.0
    %1639 = vmatpush1.msra.mxu0 0.0
    %1640 = vmatprep.subr.mxu0 0.0
    %1641 = vmatpush1.msra.mxu0 0.0
    %1642 = vmatprep.subr.mxu0 0.0
    %1643 = vmatpush1.msra.mxu0 0.0
    %1644 = vmatprep.subr.mxu0 0.0
    %1645 = vmatpush1.msra.mxu0 0.0
    %1646 = vmatprep.subr.mxu0 0.0
    %1647 = vmatpush1.msra.mxu0 0.0
    %1648 = vmatprep.subr.mxu0 0.0
    %1649 = vmatpush1.msra.mxu0 0.0
    %1650 = vmatprep.mubr.f32.mxu0 0.0
    %1651 = vmatmul.mubr.f32.gmra.mrb[0].mxu0 %v1581
    %v1652 = vpop.f32.mrb[0].mxu0
    %v1653 = vadd.f32 0.0, %v1652
    %v1654 = vpop.f32.mrb[0].mxu0
    %v1655 = vadd.f32 0.0, %v1654
    %1656 = vdwg.mxu0
    %1657 = vmatprep.subr.mxu0 0.0
    %1658 = vmatpush1.msra.mxu0 %v367
    %1659 = vmatprep.subr.mxu0 0.0
    %1660 = vmatpush1.msra.mxu0 %v370
    %1661 = vmatprep.subr.mxu0 0.0
    %1662 = vmatpush1.msra.mxu0 %v373
    %1663 = vmatprep.subr.mxu0 0.0
    %1664 = vmatpush1.msra.mxu0 %v376
    %1665 = vmatprep.subr.mxu0 0.0
    %1666 = vmatpush1.msra.mxu0 %v379
    %1667 = vmatprep.subr.mxu0 0.0
    %1668 = vmatpush1.msra.mxu0 %v382
    %1669 = vmatprep.subr.mxu0 0.0
    %1670 = vmatpush1.msra.mxu0 %v385
    %1671 = vmatprep.subr.mxu0 0.0
    %1672 = vmatpush1.msra.mxu0 %v388
    %1673 = vmatprep.subr.mxu0 0.0
    %1674 = vmatpush1.msra.mxu0 %v391
    %1675 = vmatprep.subr.mxu0 0.0
    %1676 = vmatpush1.msra.mxu0 %v394
    %1677 = vmatprep.subr.mxu0 0.0
    %1678 = vmatpush1.msra.mxu0 %v397
    %1679 = vmatprep.subr.mxu0 0.0
    %1680 = vmatpush1.msra.mxu0 %v400
    %1681 = vmatprep.subr.mxu0 0.0
    %1682 = vmatpush1.msra.mxu0 %v403
    %1683 = vmatprep.subr.mxu0 0.0
    %1684 = vmatpush1.msra.mxu0 %v406
    %1685 = vmatprep.subr.mxu0 0.0
    %1686 = vmatpush1.msra.mxu0 %v409
    %1687 = vmatprep.subr.mxu0 0.0
    %1688 = vmatpush1.msra.mxu0 %v412
    %1689 = vmatprep.subr.mxu0 0.0
    %1690 = vmatpush1.msra.mxu0 0.0
    %1691 = vmatprep.subr.mxu0 0.0
    %1692 = vmatpush1.msra.mxu0 0.0
    %1693 = vmatprep.subr.mxu0 0.0
    %1694 = vmatpush1.msra.mxu0 0.0
    %1695 = vmatprep.subr.mxu0 0.0
    %1696 = vmatpush1.msra.mxu0 0.0
    %1697 = vmatprep.subr.mxu0 0.0
    %1698 = vmatpush1.msra.mxu0 0.0
    %1699 = vmatprep.subr.mxu0 0.0
    %1700 = vmatpush1.msra.mxu0 0.0
    %1701 = vmatprep.subr.mxu0 0.0
    %1702 = vmatpush1.msra.mxu0 0.0
    %1703 = vmatprep.subr.mxu0 0.0
    %1704 = vmatpush1.msra.mxu0 0.0
    %1705 = vmatprep.subr.mxu0 0.0
    %1706 = vmatpush1.msra.mxu0 0.0
    %1707 = vmatprep.subr.mxu0 0.0
    %1708 = vmatpush1.msra.mxu0 0.0
    %1709 = vmatprep.subr.mxu0 0.0
    %1710 = vmatpush1.msra.mxu0 0.0
    %1711 = vmatprep.subr.mxu0 0.0
    %1712 = vmatpush1.msra.mxu0 0.0
    %1713 = vmatprep.subr.mxu0 0.0
    %1714 = vmatpush1.msra.mxu0 0.0
    %1715 = vmatprep.subr.mxu0 0.0
    %1716 = vmatpush1.msra.mxu0 0.0
    %1717 = vmatprep.subr.mxu0 0.0
    %1718 = vmatpush1.msra.mxu0 0.0
    %1719 = vmatprep.subr.mxu0 0.0
    %1720 = vmatpush1.msra.mxu0 0.0
    %1721 = vmatprep.mubr.f32.mxu0 0.0
    %1722 = vmatmul.mubr.f32.gmra.mrb[0].mxu0 %v1581
    %v1723 = vpop.f32.mrb[0].mxu0
    %v1724 = vadd.f32 0.0, %v1723
    %v1725 = vpop.f32.mrb[0].mxu0
    %1726 = vdwg.mxu0
    %v1727 = vadd.f32 %v1583, %v1653
    %v1728 = vxor.u32 %v1727, 2147483648
    %v1729 = vmul.f32 %v1728, 1.442695
    %v1730 = vpow.pop %v1729
    %v1731 = vadd.f32 %v1730, 1.0
    %v1732 = vrcp.pop %v1731
    %v1733 = vmul.f32 1.0, %v1732
    %v1734 = vadd.f32 %v1584, %v1655
    %v1735 = vxor.u32 %v1734, 2147483648
    %v1736 = vmul.f32 %v1735, 1.442695
    %v1737 = vpow.pop %v1736
    %v1738 = vadd.f32 %v1737, 1.0
    %v1739 = vrcp.pop %v1738
    %v1740 = vmul.f32 1.0, %v1739
    %v1741 = vadd.f32 %v1724, %v577
    %v1742 = vmul.f32 %v1733, %v1741
    %v1743 = vadd.f32 %v1585, %v1742
    %v1744 = vtanh.pop %v1743
    %v1745 = vsub.f32 %v1581, %v1744
    %v1746 = vmul.f32 %v1740, %v1745
    %v1747 = vadd.f32 %v1744, %v1746
    %1748 = vst [vmem:[#allocation3] sm:$0xff] %v1747
    // Predicated region
    $region42: #{tpu_custom_call.1} parent=1 // pred_check
      %p1749 = pneg %p55
    $region43: #{tpu_custom_call.1} parent=1 // pred_check_branch
      %1751 = sbr.rel (%p1749) target = $region45
    $region44: #{tpu_custom_call.1} parent=1 // pred_region
      %v1752 = vld [vmem:[#allocation7] sm:$0xff]
      %v1753 = vld [vmem:[#allocation7 + $0x8] sm:$0xff]
      %v1754 = vld [vmem:[#allocation7 + $0x10] sm:$0xff]
      %v1755 = vld [vmem:[#allocation7 + $0x18] sm:$0xff]
      %v1756 = vld [vmem:[#allocation7 + $0x20] sm:$0xff]
      %v1757 = vld [vmem:[#allocation7 + $0x28] sm:$0xff]
      %v1758 = vld [vmem:[#allocation7 + $0x30] sm:$0xff]
      %v1759 = vld [vmem:[#allocation7 + $0x38] sm:$0xff]
      %v1760 = vld [vmem:[#allocation7 + $0x40] sm:$0xff]
      %v1761 = vld [vmem:[#allocation7 + $0x48] sm:$0xff]
      %v1762 = vld [vmem:[#allocation7 + $0x50] sm:$0xff]
      %v1763 = vld [vmem:[#allocation7 + $0x58] sm:$0xff]
      %v1764 = vld [vmem:[#allocation7 + $0x60] sm:$0xff]
      %v1765 = vld [vmem:[#allocation7 + $0x68] sm:$0xff]
      %v1766 = vld [vmem:[#allocation7 + $0x70] sm:$0xff]
      %v1767 = vld [vmem:[#allocation7 + $0x78] sm:$0xff]
      %v1768 = vld [vmem:[%s6] sm:$0x1]
      %v1770 = vlaneseq
      %v1771 = vshrl.u32 %v1770, 7
      %v1772 = vsub.s32 0, %v1771
      %v1773 = vrot.slane %v1768, %v1772
      %1775 = vmatprep.subr.mxu0 0.0
      %1776 = vmatpush1.msra.mxu0 %v1752
      %1777 = vmatprep.subr.mxu0 0.0
      %1778 = vmatpush1.msra.mxu0 %v1753
      %1779 = vmatprep.subr.mxu0 0.0
      %1780 = vmatpush1.msra.mxu0 %v1754
      %1781 = vmatprep.subr.mxu0 0.0
      %1782 = vmatpush1.msra.mxu0 %v1755
      %1783 = vmatprep.subr.mxu0 0.0
      %1784 = vmatpush1.msra.mxu0 %v1756
      %1785 = vmatprep.subr.mxu0 0.0
      %1786 = vmatpush1.msra.mxu0 %v1757
      %1787 = vmatprep.subr.mxu0 0.0
      %1788 = vmatpush1.msra.mxu0 %v1758
      %1789 = vmatprep.subr.mxu0 0.0
      %1790 = vmatpush1.msra.mxu0 %v1759
      %1791 = vmatprep.subr.mxu0 0.0
      %1792 = vmatpush1.msra.mxu0 %v1760
      %1793 = vmatprep.subr.mxu0 0.0
      %1794 = vmatpush1.msra.mxu0 %v1761
      %1795 = vmatprep.subr.mxu0 0.0
      %1796 = vmatpush1.msra.mxu0 %v1762
      %1797 = vmatprep.subr.mxu0 0.0
      %1798 = vmatpush1.msra.mxu0 %v1763
      %1799 = vmatprep.subr.mxu0 0.0
      %1800 = vmatpush1.msra.mxu0 %v1764
      %1801 = vmatprep.subr.mxu0 0.0
      %1802 = vmatpush1.msra.mxu0 %v1765
      %1803 = vmatprep.subr.mxu0 0.0
      %1804 = vmatpush1.msra.mxu0 %v1766
      %1805 = vmatprep.subr.mxu0 0.0
      %1806 = vmatpush1.msra.mxu0 %v1767
      %1807 = vmatprep.subr.mxu0 0.0
      %1808 = vmatpush1.msra.mxu0 0.0
      %1809 = vmatprep.subr.mxu0 0.0
      %1810 = vmatpush1.msra.mxu0 0.0
      %1811 = vmatprep.subr.mxu0 0.0
      %1812 = vmatpush1.msra.mxu0 0.0
      %1813 = vmatprep.subr.mxu0 0.0
      %1814 = vmatpush1.msra.mxu0 0.0
      %1815 = vmatprep.subr.mxu0 0.0
      %1816 = vmatpush1.msra.mxu0 0.0
      %1817 = vmatprep.subr.mxu0 0.0
      %1818 = vmatpush1.msra.mxu0 0.0
      %1819 = vmatprep.subr.mxu0 0.0
      %1820 = vmatpush1.msra.mxu0 0.0
      %1821 = vmatprep.subr.mxu0 0.0
      %1822 = vmatpush1.msra.mxu0 0.0
      %1823 = vmatprep.subr.mxu0 0.0
      %1824 = vmatpush1.msra.mxu0 0.0
      %1825 = vmatprep.subr.mxu0 0.0
      %1826 = vmatpush1.msra.mxu0 0.0
      %1827 = vmatprep.subr.mxu0 0.0
      %1828 = vmatpush1.msra.mxu0 0.0
      %1829 = vmatprep.subr.mxu0 0.0
      %1830 = vmatpush1.msra.mxu0 0.0
      %1831 = vmatprep.subr.mxu0 0.0
      %1832 = vmatpush1.msra.mxu0 0.0
      %1833 = vmatprep.subr.mxu0 0.0
      %1834 = vmatpush1.msra.mxu0 0.0
      %1835 = vmatprep.subr.mxu0 0.0
      %1836 = vmatpush1.msra.mxu0 0.0
      %1837 = vmatprep.subr.mxu0 0.0
      %1838 = vmatpush1.msra.mxu0 0.0
      %1839 = vmatprep.mubr.f32.mxu0 0.0
      %1840 = vmatmul.mubr.f32.gmra.mrb[0].mxu0 %v1747
      %v1841 = vpop.f32.mrb[0].mxu0
      %v1842 = vadd.f32 %v1773, %v1841
      %v1843 = vpop.f32.mrb[0].mxu0
      %1844 = vdwg.mxu0
      %1845 = vst [vmem:[#allocation9] sm:$0xff] %v1842
    $region45: #{tpu_custom_call.1} parent=1 // pred_fallthru
      _
    // Predicated region
    $region46: #{tpu_custom_call.1} parent=1 // pred_check
      _
    $region47: #{tpu_custom_call.1} parent=1 // pred_check_branch
      %1847 = sbr.rel (0) target = $region49
    $region48: #{tpu_custom_call.1} parent=1 // pred_region
      %s1849 = ssub.s32 128, 128
      %1850 = vsyncadd [#allocation6], %s1849
      %s1852 = sshll.u32 [#allocation9], 4
      %s1853 = int_to_ptr.vmem [resolvable:$true] %s1852
      %1855 = dma.vmem_to_hbm [thread:$0]  %s1853, 128, %s7, [#allocation6]
    $region49: #{tpu_custom_call.1} parent=1 // pred_fallthru
      _
    // Predicated region
    $region50: #{tpu_custom_call.1} parent=1 // pred_check
      _
    $region51: #{tpu_custom_call.1} parent=1 // pred_check_branch
      %1857 = sbr.rel (0) target = $region53
    $region52: #{tpu_custom_call.1} parent=1 // pred_region
      %1858 = dma.done [#allocation6], 128
    $region53: #{tpu_custom_call.1} parent=1 // pred_fallthru
      _
    %1859 = vsyncpa [#allocation5], 1
    %1860 = vsyncpa [#allocation8], 1
    %1861 = vsyncpa [#allocation6], 1

</llo_original>
